<compile_context>
chip_gen: v7x
topology: tpu7x:2x2x1
jax: 0.10.0
libtpu: 0.0.40
codegen_flags: <defaults>
</compile_context>

<pallas_src>
import math

import jax
import jax.numpy as jnp
from jax.experimental import pallas as pl
from jax.experimental.pallas import tpu as pltpu


# ----------------------------- small math helpers ---------------------------

def _layernorm(x, gamma, beta, eps=1e-6):
    # nn.LayerNorm(d_model, eps=1e-06) -- the module explicitly sets eps=1e-6.
    mu = jnp.mean(x, axis=-1, keepdims=True)
    var = jnp.mean((x - mu) ** 2, axis=-1, keepdims=True)
    return (x - mu) * jax.lax.rsqrt(var + eps) * gamma + beta


def _gelu_exact(x):
    # PyTorch nn.GELU() default (erf based) -- used by the faithful f32 reference.
    return 0.5 * x * (1.0 + jax.lax.erf(x * (1.0 / math.sqrt(2.0))))


def _gelu_tanh(x):
    # tanh approximation: runs on the EUP slot instead of a long VPU erf
    # polynomial; |gelu_tanh - gelu_erf| < ~3e-4 (accepted numerics tradeoff).
    c = math.sqrt(2.0 / math.pi)
    return 0.5 * x * (1.0 + jnp.tanh(c * (x + 0.044715 * (x * x * x))))


def _build_toeplitz(conv_w, D):
    """(C, K) depthwise causal conv weights -> (C, D, D) matrices T such that
    trend_row = x_row @ T[c].  Matches PyTorch Conv1d (cross-correlation) on a
    left-zero-padded input: trend[t] = sum_{s<=t} w[K-1 - t + s] * x[s]."""
    C, K = conv_w.shape
    s = jnp.arange(D)[:, None]          # input position
    t = jnp.arange(D)[None, :]          # output position
    k = K - 1 - t + s                   # kernel tap index
    valid = (k >= 0) & (k <= K - 1)
    kc = jnp.clip(k, 0, K - 1)
    return jnp.where(valid[None, :, :], conv_w[:, kc], 0.0)


# --------------------------------- kernel -----------------------------------

def _deci_kernel(x_ref, toep_ref, cbias_ref,
                 gw1_ref, gb1_ref, gw2_ref, gb2_ref, gow_ref, gob_ref,
                 n1g_ref, n1b_ref,
                 mw1_ref, mb1_ref, mw2_ref, mb2_ref,
                 n2g_ref, n2b_ref,
                 pool_ref, hw_ref, hb_ref,
                 cls_ref, res_ref):
    rows = x_ref.shape[0]
    C = toep_ref.shape[0]

    x = x_ref[...]                                   # (rows, D) f32
    x_bf = x.astype(jnp.bfloat16)
    cbias = cbias_ref[...]                           # (C, D) f32

    # ---- Trend_ext: depthwise causal Conv1d as per-channel Toeplitz matmuls
    # on the MXU.  Rows are batch-major with channel minor (rows_t is a
    # multiple of C, so the local channel of row r is r % C); the per-channel
    # products are merged with a cheap per-row select.  Dropout = identity.
    ch = jax.lax.broadcasted_iota(jnp.int32, (rows, 1), 0) % C
    trend = (jnp.dot(x_bf, toep_ref[0], preferred_element_type=jnp.float32)
             + cbias[0:1, :])
    for c in range(1, C):                            # C is small; trace-time loop
        t_c = (jnp.dot(x_bf, toep_ref[c], preferred_element_type=jnp.float32)
               + cbias[c:c + 1, :])
        trend = jnp.where(ch == c, t_c, trend)

    res1 = x - trend                                 # Seasonal_ext input (f32)

    # ---- Seasonal_ext: bf16 MXU operands, f32 accumulation / norms / acts ----
    def mm(a_f32, w_ref):
        return jnp.dot(a_f32.astype(jnp.bfloat16), w_ref[...],
                       preferred_element_type=jnp.float32)

    h = _gelu_tanh(mm(res1, gw1_ref) + gb1_ref[...])
    gate = jax.nn.sigmoid(mm(h, gw2_ref) + gb2_ref[...])
    gate_out = mm(res1 * gate, gow_ref) + gob_ref[...]
    emb1 = _layernorm(gate_out + res1, n1g_ref[...], n1b_ref[...])
    h2 = _gelu_tanh(mm(emb1, mw1_ref) + mb1_ref[...])
    emb2 = mm(h2, mw2_ref) + mb2_ref[...]
    seasonal = _layernorm(emb2 + emb1, n2g_ref[...], n2b_ref[...])

    # ---- residual output: lane-dense (rows, D) slab, no in-kernel reshape ----
    res_ref[...] = (res1 - seasonal).astype(res_ref.dtype)

    # ---- classifier heads: channel mean via one-hot pool matmul (bf16-exact
    # selection, 1/C scale in f32) + ONE lane-dense block-diagonal head matmul
    # producing the packed [cls_trend | cls_seasonal | pad] slab.
    pool = pool_ref[...]                             # (TB, rows) bf16 one-hot
    inv_c = jnp.float32(1.0 / C)
    trend_mean = jnp.dot(pool, trend.astype(jnp.bfloat16),
                         preferred_element_type=jnp.float32) * inv_c
    seas_mean = jnp.dot(pool, seasonal.astype(jnp.bfloat16),
                        preferred_element_type=jnp.float32) * inv_c
    means = jnp.concatenate([trend_mean, seas_mean], axis=1)       # (TB, 2D)
    cls = jnp.dot(means.astype(jnp.bfloat16), hw_ref[...],
                  preferred_element_type=jnp.float32) + hb_ref[...]
    cls_ref[0, :, :] = cls                           # full-width (lane-dense) store


# ------------------------------ tiling helpers ------------------------------

_VMEM_BUDGET_FRACTION = 0.7   # ~25-30% headroom per the review


def _vmem_budget_bytes():
    try:
        cap = pltpu.get_tpu_info().vmem_capacity_bytes
    except Exception:
        cap = 64 << 20        # v7x per-TensorCore VMEM (smallest of v5e/v6e/v7x)
    return int(cap * _VMEM_BUDGET_FRACTION)


def _estimate_tile_vmem_bytes(TB, C, D, cls_pad, res_itemsize):
    rows_t = TB * C
    act = 2 * rows_t * D * 4                    # x input block, double-buffered
    act += 2 * rows_t * D * res_itemsize        # res output block, double-buffered
    act += 2 * TB * cls_pad * 4                 # packed cls block, double-buffered
    live = 14 * rows_t * D * 4                  # worst-case live f32 intermediates
    wts = 2 * (C * D * D + 9 * D * D + 2 * D * cls_pad)   # bf16 weights (1 copy)
    wts += 4 * (C * D + 12 * D + cls_pad) + 2 * TB * rows_t
    return act + live + wts


def _pick_tile_batches(B, C, D, cls_pad, res_itemsize, budget):
    """Largest batch tile TB that fits the VMEM budget.  Constraints: TB | B and
    (TB*C) % 8 == 0 or TB == B (sublane rule applies only to rows_t; the packed
    cls output is emitted as a (tiles, TB, cls_pad) slab so TB itself needs no
    multiple-of-8 constraint).  Prefer >=2 grid steps (even count if possible)
    so the 'parallel' grid axis can shard across both v7x TensorCores."""
    cands = [tb for tb in range(1, B + 1)
             if B % tb == 0 and ((tb * C) % 8 == 0 or tb == B)]
    fits = [tb for tb in cands
            if _estimate_tile_vmem_bytes(tb, C, D, cls_pad, res_itemsize) <= budget]
    if not fits:
        return min(cands)                       # smallest legal tile (tiny-VMEM corner)
    multi = [tb for tb in fits if B // tb >= 2]
    if multi:
        return max(multi, key=lambda tb: ((B // tb) % 2 == 0, tb))
    return max(fits)


def _rep_spec(shape):
    """Replicated (grid-invariant) operand: full-array block at block index 0.
    Single-buffered via pipeline_mode=pl.Buffered(1) when supported, so weights
    are not double-buffered in VMEM."""
    ndim = len(shape)
    index_map = lambda *_: (0,) * ndim
    buffered = getattr(pl, "Buffered", None)
    if buffered is not None:
        try:
            return pl.BlockSpec(shape, index_map, pipeline_mode=buffered(1))
        except TypeError:
            pass
    return pl.BlockSpec(shape, index_map)


# -------------------------------- entry point --------------------------------

def deci_block(x, params, *, res_dtype=jnp.float32):
    """DeCI_Block forward (eval mode) as one Pallas TPU kernel.

    x: (B, C, D) float32.  Returns (cls_trend, cls_seasonal, res).
    res_dtype=jnp.bfloat16 halves the residual writeback if the consumer
    tolerates it (kept f32 by default to preserve module semantics).
    """
    B, C, D = x.shape
    R = B * C
    p = params
    out_dim = p['trend_cls_w'].shape[1]
    cls_pad = max(128, -(-2 * out_dim // 128) * 128)   # lane-dense packed cls width

    # --- one-time parameter transforms (cheap; would be cached in production) ---
    toep = _build_toeplitz(p['conv_w'].astype(jnp.float32), D).astype(jnp.bfloat16)
    cbias = jnp.broadcast_to(p['conv_b'].reshape(C, 1).astype(jnp.float32), (C, D))
    head_w = jnp.zeros((2 * D, cls_pad), jnp.float32)
    head_w = head_w.at[:D, :out_dim].set(p['trend_cls_w'].astype(jnp.float32))
    head_w = head_w.at[D:, out_dim:2 * out_dim].set(p['seasonal_cls_w'].astype(jnp.float32))
    head_w = head_w.astype(jnp.bfloat16)               # block-diagonal packed heads
    head_b = jnp.zeros((1, cls_pad), jnp.float32)
    head_b = head_b.at[:, :out_dim].set(p['trend_cls_b'].astype(jnp.float32))
    head_b = head_b.at[:, out_dim:2 * out_dim].set(p['seasonal_cls_b'].astype(jnp.float32))

    budget = _vmem_budget_bytes()
    res_itemsize = jnp.dtype(res_dtype).itemsize
    TB = _pick_tile_batches(B, C, D, cls_pad, res_itemsize, budget)
    rows_t = TB * C
    num_tiles = B // TB

    # One-hot channel->batch pooling matrix (values 0/1: exact in bf16; the 1/C
    # mean scale is applied in f32 inside the kernel).  Hoisted out of the body.
    pool = (jnp.arange(rows_t) // C == jnp.arange(TB)[:, None]).astype(jnp.bfloat16)

    # Single 2-D row layout; no pad / tile HBM round-trip (1x input traffic).
    x2 = x.reshape(R, D).astype(jnp.float32)

    args = (x2, toep, cbias,
            p['gate_w1'], p['gate_b1'], p['gate_w2'], p['gate_b2'],
            p['gate_out_w'], p['gate_out_b'],
            p['norm1_g'], p['norm1_b'],
            p['mlp_w1'], p['mlp_b1'], p['mlp_w2'], p['mlp_b2'],
            p['norm2_g'], p['norm2_b'],
            pool, head_w, head_b)

    in_specs = [pl.BlockSpec((rows_t, D), lambda i: (i, 0))]
    in_specs += [_rep_spec(a.shape) for a in args[1:]]

    out_specs = (pl.BlockSpec((1, TB, cls_pad), lambda i: (i, 0, 0)),
                 pl.BlockSpec((rows_t, D), lambda i: (i, 0)))
    out_shape = (jax.ShapeDtypeStruct((num_tiles, TB, cls_pad), jnp.float32),
                 jax.ShapeDtypeStruct((R, D), res_dtype))

    cls3, res2 = pl.pallas_call(
        _deci_kernel,
        grid=(num_tiles,),
        in_specs=in_specs,
        out_specs=out_specs,
        out_shape=out_shape,
        compiler_params=pltpu.CompilerParams(
            dimension_semantics=("parallel",),
            vmem_limit_bytes=int(budget)),
    )(*args)

    cls = cls3.reshape(B, cls_pad)
    cls_t = cls[:, :out_dim]
    cls_s = cls[:, out_dim:2 * out_dim]
    return cls_t, cls_s, res2.reshape(B, C, D)


# ------------------------------ params & reference ---------------------------

def init_params(key, channel, d_model, classes):
    """Deterministic synthetic parameters with the PyTorch module's shapes.
    Seasonal_ext GEMM weights are stored bf16 (half the weight DMA/VMEM, native
    bf16 MXU passes); biases, LayerNorm affine, conv and classifier weights
    stay f32 (heads are bf16-packed inside the wrapper)."""
    out_dim = 1 if classes == 2 else classes
    D = d_model

    def linear(k, fan_in, fan_out, dtype=jnp.float32):
        bound = 1.0 / math.sqrt(fan_in)
        kw, kb = jax.random.split(k)
        w = jax.random.uniform(kw, (fan_in, fan_out), jnp.float32, -bound, bound)
        b = jax.random.uniform(kb, (1, fan_out), jnp.float32, -bound, bound)
        return w.astype(dtype), b

    ks = jax.random.split(key, 7)
    gate_w1, gate_b1 = linear(ks[0], D, 2 * D, jnp.bfloat16)
    gate_w2, gate_b2 = linear(ks[1], 2 * D, D, jnp.bfloat16)
    gate_out_w, gate_out_b = linear(ks[2], D, D, jnp.bfloat16)
    mlp_w1, mlp_b1 = linear(ks[3], D, 2 * D, jnp.bfloat16)
    mlp_w2, mlp_b2 = linear(ks[4], 2 * D, D, jnp.bfloat16)
    trend_cls_w, trend_cls_b = linear(ks[5], D, out_dim)
    seasonal_cls_w, seasonal_cls_b = linear(ks[6], D, out_dim)

    # Trend_ext conv init: weight = softmax(ones) over the kernel axis (= 1/K),
    # bias = 0 -- the PyTorch construction; kernel_size == d_model.
    K = d_model
    conv_w = jax.nn.softmax(jnp.ones((channel, K), jnp.float32), axis=-1)   # (C, K)
    conv_b = jnp.zeros((channel, 1), jnp.float32)                           # (C, 1)

    return dict(
        conv_w=conv_w, conv_b=conv_b,
        gate_w1=gate_w1, gate_b1=gate_b1, gate_w2=gate_w2, gate_b2=gate_b2,
        gate_out_w=gate_out_w, gate_out_b=gate_out_b,
        norm1_g=jnp.ones((1, D), jnp.float32), norm1_b=jnp.zeros((1, D), jnp.float32),
        mlp_w1=mlp_w1, mlp_b1=mlp_b1, mlp_w2=mlp_w2, mlp_b2=mlp_b2,
        norm2_g=jnp.ones((1, D), jnp.float32), norm2_b=jnp.zeros((1, D), jnp.float32),
        trend_cls_w=trend_cls_w, trend_cls_b=trend_cls_b,
        seasonal_cls_w=seasonal_cls_w, seasonal_cls_b=seasonal_cls_b,
    )


def reference(x, p, *, mixed=False):
    """Pure-JAX reference for the PyTorch forward (eval mode: dropout = identity).

    mixed=False: faithful f32 / erf-GELU reference (PyTorch semantics).
    mixed=True : mirrors the kernel's precision recipe (bf16 Toeplitz conv,
                 bf16 matmul operands with f32 accumulation, tanh GELU) for a
                 tight implementation check.
    """
    B, C, D = x.shape
    w = p['conv_w'].astype(jnp.float32)
    K = w.shape[1]
    gelu = _gelu_tanh if mixed else _gelu_exact

    def mm(a, wgt):
        if mixed:
            return jnp.dot(a.astype(jnp.bfloat16), wgt.astype(jnp.bfloat16),
                           preferred_element_type=jnp.float32)
        return jnp.dot(a, wgt.astype(jnp.float32),
                       precision=jax.lax.Precision.HIGHEST)

    if mixed:
        toep = _build_toeplitz(w, D).astype(jnp.bfloat16)
        trend = jnp.stack(
            [jnp.dot(x[:, c].astype(jnp.bfloat16), toep[c],
                     preferred_element_type=jnp.float32) for c in range(C)],
            axis=1) + p['conv_b'].reshape(1, C, 1)
    else:
        xpad = jnp.pad(x, ((0, 0), (0, 0), (K - 1, 0)))
        windows = jnp.stack([xpad[:, :, k:k + D] for k in range(K)], axis=2)
        trend = jnp.einsum('ck,bckt->bct', w, windows,
                           precision=jax.lax.Precision.HIGHEST)
        trend = trend + p['conv_b'].reshape(1, C, 1)

    res1 = x - trend
    xs = res1.reshape(B * C, D)
    h = gelu(mm(xs, p['gate_w1']) + p['gate_b1'])
    gate = jax.nn.sigmoid(mm(h, p['gate_w2']) + p['gate_b2'])
    gate_out = mm(xs * gate, p['gate_out_w']) + p['gate_out_b']
    emb1 = _layernorm(gate_out + xs, p['norm1_g'], p['norm1_b'])
    emb2 = mm(gelu(mm(emb1, p['mlp_w1']) + p['mlp_b1']), p['mlp_w2']) + p['mlp_b2']
    seasonal = _layernorm(emb2 + emb1, p['norm2_g'], p['norm2_b'])
    res = (xs - seasonal).reshape(B, C, D)

    if mixed:
        tmean = jnp.mean(trend.astype(jnp.bfloat16).astype(jnp.float32), axis=1)
        smean = jnp.mean(seasonal.astype(jnp.bfloat16).astype(jnp.float32)
                         .reshape(B, C, D), axis=1)
        cls_t = mm(tmean, p['trend_cls_w']) + p['trend_cls_b']
        cls_s = mm(smean, p['seasonal_cls_w']) + p['seasonal_cls_b']
    else:
        cls_t = jnp.dot(jnp.mean(trend, axis=1), p['trend_cls_w'],
                        precision=jax.lax.Precision.HIGHEST) + p['trend_cls_b']
        cls_s = jnp.dot(jnp.mean(seasonal.reshape(B, C, D), axis=1),
                        p['seasonal_cls_w'],
                        precision=jax.lax.Precision.HIGHEST) + p['seasonal_cls_b']
    return cls_t, cls_s, res


if __name__ == "__main__":
    B, C, D, classes = 2, 4, 32, 3      # configs.channel=4, d_model=32, classes=3
    key = jax.random.PRNGKey(0)
    kx, kp = jax.random.split(key)
    x = jax.random.normal(kx, (B, C, D), jnp.float32)
    params = init_params(kp, C, D, classes)

    cls_t, cls_s, res = jax.block_until_ready(deci_block(x, params))
    assert cls_t.shape == (B, 3) and cls_s.shape == (B, 3) and res.shape == (B, C, D)

    # 1) Tight check vs a reference mirroring the kernel's precision recipe
    #    (validates the Toeplitz conv construction, tiling and layer wiring).
    mt, ms, mr = reference(x, params, mixed=True)
    assert jnp.allclose(cls_t, mt, atol=1e-2, rtol=1e-2)
    assert jnp.allclose(cls_s, ms, atol=1e-2, rtol=1e-2)
    assert jnp.allclose(res, mr, atol=1e-2, rtol=1e-2)

    # 2) Loose check vs the faithful f32 / erf-GELU reference; the gap budget
    #    is the bf16 matmul operands + tanh-GELU approximation (the accepted
    #    performance/precision tradeoffs).
    rt, rs, rr = reference(x, params, mixed=False)
    assert jnp.allclose(cls_t, rt, atol=3e-2, rtol=3e-2)
    assert jnp.allclose(cls_s, rs, atol=3e-2, rtol=3e-2)
    assert jnp.allclose(res, rr, atol=3e-2, rtol=3e-2)

    print("KERNEL_OK")
</pallas_src>

<mosaic_0001>
module attributes {stable_mosaic.version = 11 : i64} {
  func.func @_deci_kernel(%arg0: i32, %arg1: memref<8x32xf32, #tpu.memory_space<vmem>>, %arg2: memref<4x32x32xbf16, #tpu.memory_space<vmem>>, %arg3: memref<4x32xf32, #tpu.memory_space<vmem>>, %arg4: memref<32x64xbf16, #tpu.memory_space<vmem>>, %arg5: memref<1x64xf32, #tpu.memory_space<vmem>>, %arg6: memref<64x32xbf16, #tpu.memory_space<vmem>>, %arg7: memref<1x32xf32, #tpu.memory_space<vmem>>, %arg8: memref<32x32xbf16, #tpu.memory_space<vmem>>, %arg9: memref<1x32xf32, #tpu.memory_space<vmem>>, %arg10: memref<1x32xf32, #tpu.memory_space<vmem>>, %arg11: memref<1x32xf32, #tpu.memory_space<vmem>>, %arg12: memref<32x64xbf16, #tpu.memory_space<vmem>>, %arg13: memref<1x64xf32, #tpu.memory_space<vmem>>, %arg14: memref<64x32xbf16, #tpu.memory_space<vmem>>, %arg15: memref<1x32xf32, #tpu.memory_space<vmem>>, %arg16: memref<1x32xf32, #tpu.memory_space<vmem>>, %arg17: memref<1x32xf32, #tpu.memory_space<vmem>>, %arg18: memref<2x8xbf16, #tpu.memory_space<vmem>>, %arg19: memref<64x128xbf16, #tpu.memory_space<vmem>>, %arg20: memref<1x128xf32, #tpu.memory_space<vmem>>, %arg21: memref<1x2x128xf32, #tpu.memory_space<vmem>>, %arg22: memref<8x32xf32, #tpu.memory_space<vmem>>) attributes {dimension_semantics = [#tpu.dimension_semantics<parallel>], iteration_bounds = array<i64: 1>, scalar_prefetch = 0 : i64, scratch_operands = 0 : i64, tpu.core_type = #tpu.core_type<tc>, window_params = [{transform_indices = @transform_0, window_bounds = array<i64: 8, 32>}, {pipeline_mode = #tpu.pipeline_mode<synchronous>, transform_indices = @transform_1, window_bounds = array<i64: 4, 32, 32>}, {pipeline_mode = #tpu.pipeline_mode<synchronous>, transform_indices = @transform_2, window_bounds = array<i64: 4, 32>}, {pipeline_mode = #tpu.pipeline_mode<synchronous>, transform_indices = @transform_3, window_bounds = array<i64: 32, 64>}, {pipeline_mode = #tpu.pipeline_mode<synchronous>, transform_indices = @transform_4, window_bounds = array<i64: 1, 64>}, {pipeline_mode = #tpu.pipeline_mode<synchronous>, transform_indices = @transform_5, window_bounds = array<i64: 64, 32>}, {pipeline_mode = #tpu.pipeline_mode<synchronous>, transform_indices = @transform_6, window_bounds = array<i64: 1, 32>}, {pipeline_mode = #tpu.pipeline_mode<synchronous>, transform_indices = @transform_7, window_bounds = array<i64: 32, 32>}, {pipeline_mode = #tpu.pipeline_mode<synchronous>, transform_indices = @transform_8, window_bounds = array<i64: 1, 32>}, {pipeline_mode = #tpu.pipeline_mode<synchronous>, transform_indices = @transform_9, window_bounds = array<i64: 1, 32>}, {pipeline_mode = #tpu.pipeline_mode<synchronous>, transform_indices = @transform_10, window_bounds = array<i64: 1, 32>}, {pipeline_mode = #tpu.pipeline_mode<synchronous>, transform_indices = @transform_11, window_bounds = array<i64: 32, 64>}, {pipeline_mode = #tpu.pipeline_mode<synchronous>, transform_indices = @transform_12, window_bounds = array<i64: 1, 64>}, {pipeline_mode = #tpu.pipeline_mode<synchronous>, transform_indices = @transform_13, window_bounds = array<i64: 64, 32>}, {pipeline_mode = #tpu.pipeline_mode<synchronous>, transform_indices = @transform_14, window_bounds = array<i64: 1, 32>}, {pipeline_mode = #tpu.pipeline_mode<synchronous>, transform_indices = @transform_15, window_bounds = array<i64: 1, 32>}, {pipeline_mode = #tpu.pipeline_mode<synchronous>, transform_indices = @transform_16, window_bounds = array<i64: 1, 32>}, {pipeline_mode = #tpu.pipeline_mode<synchronous>, transform_indices = @transform_17, window_bounds = array<i64: 2, 8>}, {pipeline_mode = #tpu.pipeline_mode<synchronous>, transform_indices = @transform_18, window_bounds = array<i64: 64, 128>}, {pipeline_mode = #tpu.pipeline_mode<synchronous>, transform_indices = @transform_19, window_bounds = array<i64: 1, 128>}, {transform_indices = @transform_20, window_bounds = array<i64: 1, 2, 128>}, {transform_indices = @transform_21, window_bounds = array<i64: 8, 32>}]} {
    %c0 = arith.constant 0 : index
    %c0_0 = arith.constant 0 : index
    %0 = vector.load %arg1[%c0, %c0_0] : memref<8x32xf32, #tpu.memory_space<vmem>>, vector<8x32xf32>
    %1 = arith.truncf %0 : vector<8x32xf32> to vector<8x32xbf16>
    %c0_1 = arith.constant 0 : index
    %c0_2 = arith.constant 0 : index
    %2 = vector.load %arg3[%c0_1, %c0_2] : memref<4x32xf32, #tpu.memory_space<vmem>>, vector<4x32xf32>
    %3 = tpu.iota {dimensions = array<i32: 0>} : vector<8x1xi32>
    %c4_i32 = arith.constant 4 : i32
    %c0_i32 = arith.constant 0 : i32
    %4 = arith.cmpi eq, %c4_i32, %c0_i32 : i32
    %c1_i32 = arith.constant 1 : i32
    %5 = arith.select %4, %c1_i32, %c4_i32 : i32
    %6 = vector.broadcast %5 : i32 to vector<8x1xi32>
    %7 = arith.remsi %3, %6 : vector<8x1xi32>
    %c0_i32_3 = arith.constant 0 : i32
    %8 = vector.broadcast %c0_i32_3 : i32 to vector<8x1xi32>
    %9 = arith.cmpi ne, %7, %8 : vector<8x1xi32>
    %c0_i32_4 = arith.constant 0 : i32
    %10 = vector.broadcast %c0_i32_4 : i32 to vector<8x1xi32>
    %11 = arith.cmpi slt, %7, %10 : vector<8x1xi32>
    %c0_i32_5 = arith.constant 0 : i32
    %12 = arith.cmpi slt, %5, %c0_i32_5 : i32
    %13 = vector.broadcast %12 : i1 to vector<8x1xi1>
    %14 = vector.broadcast %13 : vector<8x1xi1> to vector<8x1xi1>
    %15 = arith.xori %11, %14 : vector<8x1xi1>
    %16 = arith.andi %15, %9 : vector<8x1xi1>
    %17 = vector.broadcast %5 : i32 to vector<8x1xi32>
    %18 = arith.addi %7, %17 : vector<8x1xi32>
    %19 = arith.select %16, %18, %7 : vector<8x1xi1>, vector<8x1xi32>
    %c0_6 = arith.constant 0 : index
    %c0_7 = arith.constant 0 : index
    %c0_8 = arith.constant 0 : index
    %20 = vector.load %arg2[%c0_6, %c0_7, %c0_8] : memref<4x32x32xbf16, #tpu.memory_space<vmem>>, vector<1x32x32xbf16>
    %21 = vector.shape_cast %20 : vector<1x32x32xbf16> to vector<32x32xbf16>
    %cst = arith.constant dense<0.000000e+00> : vector<8x32xf32>
    %22 = tpu.matmul %1, %21, %cst {dimension_numbers = #tpu.dot_dimension_numbers<[1], [0], [0], [1], [0, 0, 1, 1], [], []>} : vector<8x32xbf16>, vector<32x32xbf16>, vector<8x32xf32> -> vector<8x32xf32>
    %23 = vector.extract_strided_slice %2 {offsets = [0, 0], sizes = [1, 32], strides = [1, 1]} : vector<4x32xf32> to vector<1x32xf32>
    %24 = vector.broadcast %23 : vector<1x32xf32> to vector<8x32xf32>
    %25 = arith.addf %22, %24 : vector<8x32xf32>
    %c1 = arith.constant 1 : index
    %c0_9 = arith.constant 0 : index
    %c0_10 = arith.constant 0 : index
    %26 = vector.load %arg2[%c1, %c0_9, %c0_10] : memref<4x32x32xbf16, #tpu.memory_space<vmem>>, vector<1x32x32xbf16>
    %27 = vector.shape_cast %26 : vector<1x32x32xbf16> to vector<32x32xbf16>
    %cst_11 = arith.constant dense<0.000000e+00> : vector<8x32xf32>
    %28 = tpu.matmul %1, %27, %cst_11 {dimension_numbers = #tpu.dot_dimension_numbers<[1], [0], [0], [1], [0, 0, 1, 1], [], []>} : vector<8x32xbf16>, vector<32x32xbf16>, vector<8x32xf32> -> vector<8x32xf32>
    %29 = vector.extract_strided_slice %2 {offsets = [1, 0], sizes = [1, 32], strides = [1, 1]} : vector<4x32xf32> to vector<1x32xf32>
    %30 = vector.broadcast %29 : vector<1x32xf32> to vector<8x32xf32>
    %31 = arith.addf %28, %30 : vector<8x32xf32>
    %c1_i32_12 = arith.constant 1 : i32
    %32 = vector.broadcast %c1_i32_12 : i32 to vector<8x1xi32>
    %33 = arith.cmpi eq, %19, %32 : vector<8x1xi32>
    %34 = vector.shape_cast %33 : vector<8x1xi1> to vector<8x1xi1>
    %35 = vector.broadcast %34 : vector<8x1xi1> to vector<8x32xi1>
    %36 = arith.select %35, %31, %25 : vector<8x32xi1>, vector<8x32xf32>
    %c2 = arith.constant 2 : index
    %c0_13 = arith.constant 0 : index
    %c0_14 = arith.constant 0 : index
    %37 = vector.load %arg2[%c2, %c0_13, %c0_14] : memref<4x32x32xbf16, #tpu.memory_space<vmem>>, vector<1x32x32xbf16>
    %38 = vector.shape_cast %37 : vector<1x32x32xbf16> to vector<32x32xbf16>
    %cst_15 = arith.constant dense<0.000000e+00> : vector<8x32xf32>
    %39 = tpu.matmul %1, %38, %cst_15 {dimension_numbers = #tpu.dot_dimension_numbers<[1], [0], [0], [1], [0, 0, 1, 1], [], []>} : vector<8x32xbf16>, vector<32x32xbf16>, vector<8x32xf32> -> vector<8x32xf32>
    %40 = vector.extract_strided_slice %2 {offsets = [2, 0], sizes = [1, 32], strides = [1, 1]} : vector<4x32xf32> to vector<1x32xf32>
    %41 = vector.broadcast %40 : vector<1x32xf32> to vector<8x32xf32>
    %42 = arith.addf %39, %41 : vector<8x32xf32>
    %c2_i32 = arith.constant 2 : i32
    %43 = vector.broadcast %c2_i32 : i32 to vector<8x1xi32>
    %44 = arith.cmpi eq, %19, %43 : vector<8x1xi32>
    %45 = vector.shape_cast %44 : vector<8x1xi1> to vector<8x1xi1>
    %46 = vector.broadcast %45 : vector<8x1xi1> to vector<8x32xi1>
    %47 = arith.select %46, %42, %36 : vector<8x32xi1>, vector<8x32xf32>
    %c3 = arith.constant 3 : index
    %c0_16 = arith.constant 0 : index
    %c0_17 = arith.constant 0 : index
    %48 = vector.load %arg2[%c3, %c0_16, %c0_17] : memref<4x32x32xbf16, #tpu.memory_space<vmem>>, vector<1x32x32xbf16>
    %49 = vector.shape_cast %48 : vector<1x32x32xbf16> to vector<32x32xbf16>
    %cst_18 = arith.constant dense<0.000000e+00> : vector<8x32xf32>
    %50 = tpu.matmul %1, %49, %cst_18 {dimension_numbers = #tpu.dot_dimension_numbers<[1], [0], [0], [1], [0, 0, 1, 1], [], []>} : vector<8x32xbf16>, vector<32x32xbf16>, vector<8x32xf32> -> vector<8x32xf32>
    %51 = vector.extract_strided_slice %2 {offsets = [3, 0], sizes = [1, 32], strides = [1, 1]} : vector<4x32xf32> to vector<1x32xf32>
    %52 = vector.broadcast %51 : vector<1x32xf32> to vector<8x32xf32>
    %53 = arith.addf %50, %52 : vector<8x32xf32>
    %c3_i32 = arith.constant 3 : i32
    %54 = vector.broadcast %c3_i32 : i32 to vector<8x1xi32>
    %55 = arith.cmpi eq, %19, %54 : vector<8x1xi32>
    %56 = vector.shape_cast %55 : vector<8x1xi1> to vector<8x1xi1>
    %57 = vector.broadcast %56 : vector<8x1xi1> to vector<8x32xi1>
    %58 = arith.select %57, %53, %47 : vector<8x32xi1>, vector<8x32xf32>
    %59 = arith.subf %0, %58 : vector<8x32xf32>
    %60 = arith.truncf %59 : vector<8x32xf32> to vector<8x32xbf16>
    %c0_19 = arith.constant 0 : index
    %c0_20 = arith.constant 0 : index
    %61 = vector.load %arg4[%c0_19, %c0_20] : memref<32x64xbf16, #tpu.memory_space<vmem>>, vector<32x64xbf16>
    %cst_21 = arith.constant dense<0.000000e+00> : vector<8x64xf32>
    %62 = tpu.matmul %60, %61, %cst_21 {dimension_numbers = #tpu.dot_dimension_numbers<[1], [0], [0], [1], [0, 0, 1, 1], [], []>} : vector<8x32xbf16>, vector<32x64xbf16>, vector<8x64xf32> -> vector<8x64xf32>
    %c0_22 = arith.constant 0 : index
    %c0_23 = arith.constant 0 : index
    %63 = vector.load %arg5[%c0_22, %c0_23] : memref<1x64xf32, #tpu.memory_space<vmem>>, vector<1x64xf32>
    %64 = vector.broadcast %63 : vector<1x64xf32> to vector<8x64xf32>
    %65 = arith.addf %62, %64 : vector<8x64xf32>
    %cst_24 = arith.constant 5.000000e-01 : f32
    %66 = vector.broadcast %cst_24 : f32 to vector<8x64xf32>
    %67 = arith.mulf %66, %65 : vector<8x64xf32>
    %68 = arith.mulf %65, %65 : vector<8x64xf32>
    %69 = arith.mulf %68, %65 : vector<8x64xf32>
    %cst_25 = arith.constant 4.471500e-02 : f32
    %70 = vector.broadcast %cst_25 : f32 to vector<8x64xf32>
    %71 = arith.mulf %70, %69 : vector<8x64xf32>
    %72 = arith.addf %65, %71 : vector<8x64xf32>
    %cst_26 = arith.constant 0.797884583 : f32
    %73 = vector.broadcast %cst_26 : f32 to vector<8x64xf32>
    %74 = arith.mulf %73, %72 : vector<8x64xf32>
    %75 = math.tanh %74 : vector<8x64xf32>
    %cst_27 = arith.constant 1.000000e+00 : f32
    %76 = vector.broadcast %cst_27 : f32 to vector<8x64xf32>
    %77 = arith.addf %76, %75 : vector<8x64xf32>
    %78 = arith.mulf %67, %77 : vector<8x64xf32>
    %79 = arith.truncf %78 : vector<8x64xf32> to vector<8x64xbf16>
    %c0_28 = arith.constant 0 : index
    %c0_29 = arith.constant 0 : index
    %80 = vector.load %arg6[%c0_28, %c0_29] : memref<64x32xbf16, #tpu.memory_space<vmem>>, vector<64x32xbf16>
    %cst_30 = arith.constant dense<0.000000e+00> : vector<8x32xf32>
    %81 = tpu.matmul %79, %80, %cst_30 {dimension_numbers = #tpu.dot_dimension_numbers<[1], [0], [0], [1], [0, 0, 1, 1], [], []>} : vector<8x64xbf16>, vector<64x32xbf16>, vector<8x32xf32> -> vector<8x32xf32>
    %c0_31 = arith.constant 0 : index
    %c0_32 = arith.constant 0 : index
    %82 = vector.load %arg7[%c0_31, %c0_32] : memref<1x32xf32, #tpu.memory_space<vmem>>, vector<1x32xf32>
    %83 = vector.broadcast %82 : vector<1x32xf32> to vector<8x32xf32>
    %84 = arith.addf %81, %83 : vector<8x32xf32>
    %85 = arith.negf %84 : vector<8x32xf32>
    %86 = math.exp %85 : vector<8x32xf32>
    %cst_33 = arith.constant 1.000000e+00 : f32
    %87 = vector.broadcast %cst_33 : f32 to vector<8x32xf32>
    %88 = arith.addf %87, %86 : vector<8x32xf32>
    %89 = arith.divf %87, %88 : vector<8x32xf32>
    %90 = arith.mulf %59, %89 : vector<8x32xf32>
    %91 = arith.truncf %90 : vector<8x32xf32> to vector<8x32xbf16>
    %c0_34 = arith.constant 0 : index
    %c0_35 = arith.constant 0 : index
    %92 = vector.load %arg8[%c0_34, %c0_35] : memref<32x32xbf16, #tpu.memory_space<vmem>>, vector<32x32xbf16>
    %cst_36 = arith.constant dense<0.000000e+00> : vector<8x32xf32>
    %93 = tpu.matmul %91, %92, %cst_36 {dimension_numbers = #tpu.dot_dimension_numbers<[1], [0], [0], [1], [0, 0, 1, 1], [], []>} : vector<8x32xbf16>, vector<32x32xbf16>, vector<8x32xf32> -> vector<8x32xf32>
    %c0_37 = arith.constant 0 : index
    %c0_38 = arith.constant 0 : index
    %94 = vector.load %arg9[%c0_37, %c0_38] : memref<1x32xf32, #tpu.memory_space<vmem>>, vector<1x32xf32>
    %95 = vector.broadcast %94 : vector<1x32xf32> to vector<8x32xf32>
    %96 = arith.addf %93, %95 : vector<8x32xf32>
    %97 = arith.addf %96, %59 : vector<8x32xf32>
    %c0_39 = arith.constant 0 : index
    %c0_40 = arith.constant 0 : index
    %98 = vector.load %arg10[%c0_39, %c0_40] : memref<1x32xf32, #tpu.memory_space<vmem>>, vector<1x32xf32>
    %c0_41 = arith.constant 0 : index
    %c0_42 = arith.constant 0 : index
    %99 = vector.load %arg11[%c0_41, %c0_42] : memref<1x32xf32, #tpu.memory_space<vmem>>, vector<1x32xf32>
    %cst_43 = arith.constant dense<0.000000e+00> : vector<8xf32>
    %100 = vector.multi_reduction <add>, %97, %cst_43 [1] : vector<8x32xf32> to vector<8xf32>
    %101 = vector.shape_cast %100 : vector<8xf32> to vector<8x1xf32>
    %cst_44 = arith.constant 3.200000e+01 : f32
    %102 = vector.broadcast %cst_44 : f32 to vector<8x1xf32>
    %103 = arith.divf %101, %102 : vector<8x1xf32>
    %104 = vector.broadcast %103 : vector<8x1xf32> to vector<8x32xf32>
    %105 = arith.subf %97, %104 : vector<8x32xf32>
    %106 = arith.mulf %105, %105 : vector<8x32xf32>
    %cst_45 = arith.constant dense<0.000000e+00> : vector<8xf32>
    %107 = vector.multi_reduction <add>, %106, %cst_45 [1] : vector<8x32xf32> to vector<8xf32>
    %108 = vector.shape_cast %107 : vector<8xf32> to vector<8x1xf32>
    %cst_46 = arith.constant 3.200000e+01 : f32
    %109 = vector.broadcast %cst_46 : f32 to vector<8x1xf32>
    %110 = arith.divf %108, %109 : vector<8x1xf32>
    %111 = vector.broadcast %103 : vector<8x1xf32> to vector<8x32xf32>
    %112 = arith.subf %97, %111 : vector<8x32xf32>
    %cst_47 = arith.constant 9.99999997E-7 : f32
    %113 = vector.broadcast %cst_47 : f32 to vector<8x1xf32>
    %114 = arith.addf %110, %113 : vector<8x1xf32>
    %115 = math.rsqrt %114 : vector<8x1xf32>
    %116 = vector.broadcast %115 : vector<8x1xf32> to vector<8x32xf32>
    %117 = arith.mulf %112, %116 : vector<8x32xf32>
    %118 = vector.broadcast %98 : vector<1x32xf32> to vector<8x32xf32>
    %119 = arith.mulf %117, %118 : vector<8x32xf32>
    %120 = vector.broadcast %99 : vector<1x32xf32> to vector<8x32xf32>
    %121 = arith.addf %119, %120 : vector<8x32xf32>
    %122 = arith.truncf %121 : vector<8x32xf32> to vector<8x32xbf16>
    %c0_48 = arith.constant 0 : index
    %c0_49 = arith.constant 0 : index
    %123 = vector.load %arg12[%c0_48, %c0_49] : memref<32x64xbf16, #tpu.memory_space<vmem>>, vector<32x64xbf16>
    %cst_50 = arith.constant dense<0.000000e+00> : vector<8x64xf32>
    %124 = tpu.matmul %122, %123, %cst_50 {dimension_numbers = #tpu.dot_dimension_numbers<[1], [0], [0], [1], [0, 0, 1, 1], [], []>} : vector<8x32xbf16>, vector<32x64xbf16>, vector<8x64xf32> -> vector<8x64xf32>
    %c0_51 = arith.constant 0 : index
    %c0_52 = arith.constant 0 : index
    %125 = vector.load %arg13[%c0_51, %c0_52] : memref<1x64xf32, #tpu.memory_space<vmem>>, vector<1x64xf32>
    %126 = vector.broadcast %125 : vector<1x64xf32> to vector<8x64xf32>
    %127 = arith.addf %124, %126 : vector<8x64xf32>
    %cst_53 = arith.constant 5.000000e-01 : f32
    %128 = vector.broadcast %cst_53 : f32 to vector<8x64xf32>
    %129 = arith.mulf %128, %127 : vector<8x64xf32>
    %130 = arith.mulf %127, %127 : vector<8x64xf32>
    %131 = arith.mulf %130, %127 : vector<8x64xf32>
    %cst_54 = arith.constant 4.471500e-02 : f32
    %132 = vector.broadcast %cst_54 : f32 to vector<8x64xf32>
    %133 = arith.mulf %132, %131 : vector<8x64xf32>
    %134 = arith.addf %127, %133 : vector<8x64xf32>
    %cst_55 = arith.constant 0.797884583 : f32
    %135 = vector.broadcast %cst_55 : f32 to vector<8x64xf32>
    %136 = arith.mulf %135, %134 : vector<8x64xf32>
    %137 = math.tanh %136 : vector<8x64xf32>
    %cst_56 = arith.constant 1.000000e+00 : f32
    %138 = vector.broadcast %cst_56 : f32 to vector<8x64xf32>
    %139 = arith.addf %138, %137 : vector<8x64xf32>
    %140 = arith.mulf %129, %139 : vector<8x64xf32>
    %141 = arith.truncf %140 : vector<8x64xf32> to vector<8x64xbf16>
    %c0_57 = arith.constant 0 : index
    %c0_58 = arith.constant 0 : index
    %142 = vector.load %arg14[%c0_57, %c0_58] : memref<64x32xbf16, #tpu.memory_space<vmem>>, vector<64x32xbf16>
    %cst_59 = arith.constant dense<0.000000e+00> : vector<8x32xf32>
    %143 = tpu.matmul %141, %142, %cst_59 {dimension_numbers = #tpu.dot_dimension_numbers<[1], [0], [0], [1], [0, 0, 1, 1], [], []>} : vector<8x64xbf16>, vector<64x32xbf16>, vector<8x32xf32> -> vector<8x32xf32>
    %c0_60 = arith.constant 0 : index
    %c0_61 = arith.constant 0 : index
    %144 = vector.load %arg15[%c0_60, %c0_61] : memref<1x32xf32, #tpu.memory_space<vmem>>, vector<1x32xf32>
    %145 = vector.broadcast %144 : vector<1x32xf32> to vector<8x32xf32>
    %146 = arith.addf %143, %145 : vector<8x32xf32>
    %147 = arith.addf %146, %121 : vector<8x32xf32>
    %c0_62 = arith.constant 0 : index
    %c0_63 = arith.constant 0 : index
    %148 = vector.load %arg16[%c0_62, %c0_63] : memref<1x32xf32, #tpu.memory_space<vmem>>, vector<1x32xf32>
    %c0_64 = arith.constant 0 : index
    %c0_65 = arith.constant 0 : index
    %149 = vector.load %arg17[%c0_64, %c0_65] : memref<1x32xf32, #tpu.memory_space<vmem>>, vector<1x32xf32>
    %cst_66 = arith.constant dense<0.000000e+00> : vector<8xf32>
    %150 = vector.multi_reduction <add>, %147, %cst_66 [1] : vector<8x32xf32> to vector<8xf32>
    %151 = vector.shape_cast %150 : vector<8xf32> to vector<8x1xf32>
    %cst_67 = arith.constant 3.200000e+01 : f32
    %152 = vector.broadcast %cst_67 : f32 to vector<8x1xf32>
    %153 = arith.divf %151, %152 : vector<8x1xf32>
    %154 = vector.broadcast %153 : vector<8x1xf32> to vector<8x32xf32>
    %155 = arith.subf %147, %154 : vector<8x32xf32>
    %156 = arith.mulf %155, %155 : vector<8x32xf32>
    %cst_68 = arith.constant dense<0.000000e+00> : vector<8xf32>
    %157 = vector.multi_reduction <add>, %156, %cst_68 [1] : vector<8x32xf32> to vector<8xf32>
    %158 = vector.shape_cast %157 : vector<8xf32> to vector<8x1xf32>
    %cst_69 = arith.constant 3.200000e+01 : f32
    %159 = vector.broadcast %cst_69 : f32 to vector<8x1xf32>
    %160 = arith.divf %158, %159 : vector<8x1xf32>
    %161 = vector.broadcast %153 : vector<8x1xf32> to vector<8x32xf32>
    %162 = arith.subf %147, %161 : vector<8x32xf32>
    %cst_70 = arith.constant 9.99999997E-7 : f32
    %163 = vector.broadcast %cst_70 : f32 to vector<8x1xf32>
    %164 = arith.addf %160, %163 : vector<8x1xf32>
    %165 = math.rsqrt %164 : vector<8x1xf32>
    %166 = vector.broadcast %165 : vector<8x1xf32> to vector<8x32xf32>
    %167 = arith.mulf %162, %166 : vector<8x32xf32>
    %168 = vector.broadcast %148 : vector<1x32xf32> to vector<8x32xf32>
    %169 = arith.mulf %167, %168 : vector<8x32xf32>
    %170 = vector.broadcast %149 : vector<1x32xf32> to vector<8x32xf32>
    %171 = arith.addf %169, %170 : vector<8x32xf32>
    %172 = arith.subf %59, %171 : vector<8x32xf32>
    %c0_71 = arith.constant 0 : index
    %c0_72 = arith.constant 0 : index
    %173 = vector.load %arg22[%c0_71, %c0_72] : memref<8x32xf32, #tpu.memory_space<vmem>>, vector<8x32xf32>
    tpu.vector_store %arg22[%c0_71, %c0_72], %172 {strides = array<i32>} : memref<8x32xf32, #tpu.memory_space<vmem>>, vector<8x32xf32>,
    %c0_73 = arith.constant 0 : index
    %c0_74 = arith.constant 0 : index
    %174 = vector.load %arg18[%c0_73, %c0_74] : memref<2x8xbf16, #tpu.memory_space<vmem>>, vector<2x8xbf16>
    %175 = arith.truncf %58 : vector<8x32xf32> to vector<8x32xbf16>
    %cst_75 = arith.constant dense<0.000000e+00> : vector<2x32xf32>
    %176 = tpu.matmul %174, %175, %cst_75 {dimension_numbers = #tpu.dot_dimension_numbers<[1], [0], [0], [1], [0, 0, 1, 1], [], []>} : vector<2x8xbf16>, vector<8x32xbf16>, vector<2x32xf32> -> vector<2x32xf32>
    %cst_76 = arith.constant 2.500000e-01 : f32
    %177 = vector.broadcast %cst_76 : f32 to vector<2x32xf32>
    %178 = arith.mulf %176, %177 : vector<2x32xf32>
    %179 = arith.truncf %171 : vector<8x32xf32> to vector<8x32xbf16>
    %cst_77 = arith.constant dense<0.000000e+00> : vector<2x32xf32>
    %180 = tpu.matmul %174, %179, %cst_77 {dimension_numbers = #tpu.dot_dimension_numbers<[1], [0], [0], [1], [0, 0, 1, 1], [], []>} : vector<2x8xbf16>, vector<8x32xbf16>, vector<2x32xf32> -> vector<2x32xf32>
    %cst_78 = arith.constant 2.500000e-01 : f32
    %181 = vector.broadcast %cst_78 : f32 to vector<2x32xf32>
    %182 = arith.mulf %180, %181 : vector<2x32xf32>
    %183 = tpu.concatenate %178, %182 in 1 : vector<2x32xf32>, vector<2x32xf32> -> vector<2x64xf32>
    %184 = arith.truncf %183 : vector<2x64xf32> to vector<2x64xbf16>
    %c0_79 = arith.constant 0 : index
    %c0_80 = arith.constant 0 : index
    %185 = vector.load %arg19[%c0_79, %c0_80] : memref<64x128xbf16, #tpu.memory_space<vmem>>, vector<64x128xbf16>
    %cst_81 = arith.constant dense<0.000000e+00> : vector<2x128xf32>
    %186 = tpu.matmul %184, %185, %cst_81 {dimension_numbers = #tpu.dot_dimension_numbers<[1], [0], [0], [1], [0, 0, 1, 1], [], []>} : vector<2x64xbf16>, vector<64x128xbf16>, vector<2x128xf32> -> vector<2x128xf32>
    %c0_82 = arith.constant 0 : index
    %c0_83 = arith.constant 0 : index
    %187 = vector.load %arg20[%c0_82, %c0_83] : memref<1x128xf32, #tpu.memory_space<vmem>>, vector<1x128xf32>
    %188 = vector.broadcast %187 : vector<1x128xf32> to vector<2x128xf32>
    %189 = arith.addf %186, %188 : vector<2x128xf32>
    %c0_84 = arith.constant 0 : index
    %c0_85 = arith.constant 0 : index
    %c0_86 = arith.constant 0 : index
    %190 = vector.load %arg21[%c0_84, %c0_85, %c0_86] : memref<1x2x128xf32, #tpu.memory_space<vmem>>, vector<1x2x128xf32>
    %191 = vector.shape_cast %190 : vector<1x2x128xf32> to vector<2x128xf32>
    %192 = vector.shape_cast %189 : vector<2x128xf32> to vector<1x2x128xf32>
    tpu.vector_store %arg21[%c0_84, %c0_85, %c0_86], %192 {strides = array<i32>} : memref<1x2x128xf32, #tpu.memory_space<vmem>>, vector<1x2x128xf32>,
    return
  }
  func.func @transform_0(%arg0: i32) -> (i32, i32) {
    %c0_i32 = arith.constant 0 : i32
    %c0_i32_0 = arith.constant 0 : i32
    return %arg0, %c0_i32 : i32, i32
  }
  func.func @transform_1(%arg0: i32) -> (i32, i32, i32) {
    %c0_i32 = arith.constant 0 : i32
    %c0_i32_0 = arith.constant 0 : i32
    %c0_i32_1 = arith.constant 0 : i32
    %c0_i32_2 = arith.constant 0 : i32
    return %c0_i32, %c0_i32_0, %c0_i32_1 : i32, i32, i32
  }
  func.func @transform_2(%arg0: i32) -> (i32, i32) {
    %c0_i32 = arith.constant 0 : i32
    %c0_i32_0 = arith.constant 0 : i32
    %c0_i32_1 = arith.constant 0 : i32
    return %c0_i32, %c0_i32_0 : i32, i32
  }
  func.func @transform_3(%arg0: i32) -> (i32, i32) {
    %c0_i32 = arith.constant 0 : i32
    %c0_i32_0 = arith.constant 0 : i32
    %c0_i32_1 = arith.constant 0 : i32
    return %c0_i32, %c0_i32_0 : i32, i32
  }
  func.func @transform_4(%arg0: i32) -> (i32, i32) {
    %c0_i32 = arith.constant 0 : i32
    %c0_i32_0 = arith.constant 0 : i32
    %c0_i32_1 = arith.constant 0 : i32
    return %c0_i32, %c0_i32_0 : i32, i32
  }
  func.func @transform_5(%arg0: i32) -> (i32, i32) {
    %c0_i32 = arith.constant 0 : i32
    %c0_i32_0 = arith.constant 0 : i32
    %c0_i32_1 = arith.constant 0 : i32
    return %c0_i32, %c0_i32_0 : i32, i32
  }
  func.func @transform_6(%arg0: i32) -> (i32, i32) {
    %c0_i32 = arith.constant 0 : i32
    %c0_i32_0 = arith.constant 0 : i32
    %c0_i32_1 = arith.constant 0 : i32
    return %c0_i32, %c0_i32_0 : i32, i32
  }
  func.func @transform_7(%arg0: i32) -> (i32, i32) {
    %c0_i32 = arith.constant 0 : i32
    %c0_i32_0 = arith.constant 0 : i32
    %c0_i32_1 = arith.constant 0 : i32
    return %c0_i32, %c0_i32_0 : i32, i32
  }
  func.func @transform_8(%arg0: i32) -> (i32, i32) {
    %c0_i32 = arith.constant 0 : i32
    %c0_i32_0 = arith.constant 0 : i32
    %c0_i32_1 = arith.constant 0 : i32
    return %c0_i32, %c0_i32_0 : i32, i32
  }
  func.func @transform_9(%arg0: i32) -> (i32, i32) {
    %c0_i32 = arith.constant 0 : i32
    %c0_i32_0 = arith.constant 0 : i32
    %c0_i32_1 = arith.constant 0 : i32
    return %c0_i32, %c0_i32_0 : i32, i32
  }
  func.func @transform_10(%arg0: i32) -> (i32, i32) {
    %c0_i32 = arith.constant 0 : i32
    %c0_i32_0 = arith.constant 0 : i32
    %c0_i32_1 = arith.constant 0 : i32
    return %c0_i32, %c0_i32_0 : i32, i32
  }
  func.func @transform_11(%arg0: i32) -> (i32, i32) {
    %c0_i32 = arith.constant 0 : i32
    %c0_i32_0 = arith.constant 0 : i32
    %c0_i32_1 = arith.constant 0 : i32
    return %c0_i32, %c0_i32_0 : i32, i32
  }
  func.func @transform_12(%arg0: i32) -> (i32, i32) {
    %c0_i32 = arith.constant 0 : i32
    %c0_i32_0 = arith.constant 0 : i32
    %c0_i32_1 = arith.constant 0 : i32
    return %c0_i32, %c0_i32_0 : i32, i32
  }
  func.func @transform_13(%arg0: i32) -> (i32, i32) {
    %c0_i32 = arith.constant 0 : i32
    %c0_i32_0 = arith.constant 0 : i32
    %c0_i32_1 = arith.constant 0 : i32
    return %c0_i32, %c0_i32_0 : i32, i32
  }
  func.func @transform_14(%arg0: i32) -> (i32, i32) {
    %c0_i32 = arith.constant 0 : i32
    %c0_i32_0 = arith.constant 0 : i32
    %c0_i32_1 = arith.constant 0 : i32
    return %c0_i32, %c0_i32_0 : i32, i32
  }
  func.func @transform_15(%arg0: i32) -> (i32, i32) {
    %c0_i32 = arith.constant 0 : i32
    %c0_i32_0 = arith.constant 0 : i32
    %c0_i32_1 = arith.constant 0 : i32
    return %c0_i32, %c0_i32_0 : i32, i32
  }
  func.func @transform_16(%arg0: i32) -> (i32, i32) {
    %c0_i32 = arith.constant 0 : i32
    %c0_i32_0 = arith.constant 0 : i32
    %c0_i32_1 = arith.constant 0 : i32
    return %c0_i32, %c0_i32_0 : i32, i32
  }
  func.func @transform_17(%arg0: i32) -> (i32, i32) {
    %c0_i32 = arith.constant 0 : i32
    %c0_i32_0 = arith.constant 0 : i32
    %c0_i32_1 = arith.constant 0 : i32
    return %c0_i32, %c0_i32_0 : i32, i32
  }
  func.func @transform_18(%arg0: i32) -> (i32, i32) {
    %c0_i32 = arith.constant 0 : i32
    %c0_i32_0 = arith.constant 0 : i32
    %c0_i32_1 = arith.constant 0 : i32
    return %c0_i32, %c0_i32_0 : i32, i32
  }
  func.func @transform_19(%arg0: i32) -> (i32, i32) {
    %c0_i32 = arith.constant 0 : i32
    %c0_i32_0 = arith.constant 0 : i32
    %c0_i32_1 = arith.constant 0 : i32
    return %c0_i32, %c0_i32_0 : i32, i32
  }
  func.func @transform_20(%arg0: i32) -> (i32, i32, i32) {
    %c0_i32 = arith.constant 0 : i32
    %c0_i32_0 = arith.constant 0 : i32
    %c0_i32_1 = arith.constant 0 : i32
    return %arg0, %c0_i32, %c0_i32_0 : i32, i32, i32
  }
  func.func @transform_21(%arg0: i32) -> (i32, i32) {
    %c0_i32 = arith.constant 0 : i32
    %c0_i32_0 = arith.constant 0 : i32
    return %arg0, %c0_i32 : i32, i32
  }
}

</mosaic_0001>

<llo_original>
// kernel: tpu_custom_call.1
$region0: #{tpu_custom_call.1}
  #allocation0 [shape = 'u32[]', space=smem, size = 0x4, offset = 0x4, fixed_abs, tag = 'smem constant byte address 0x4 - core index']
  #allocation1 [shape = 'u32[144,128]{1,0:T(1,128)}', space=vmem, size = 0x12000, scoped, tag = 'internal scratch']
  %s0 = inlined_call_operand.hbm [shape: f32[8,32], index: 0, kind: input, shape index: {}]
  %s1 = inlined_call_operand.vmem [shape: bf16[4,32,32], index: 1, kind: input, shape index: {}]
  %s2 = inlined_call_operand.hbm [shape: f32[4,32], index: 2, kind: input, shape index: {}]
  %s3 = inlined_call_operand.hbm [shape: bf16[32,64], index: 3, kind: input, shape index: {}]
  %s4 = inlined_call_operand.vmem [shape: f32[1,64], index: 4, kind: input, shape index: {}]
  %s5 = inlined_call_operand.vmem [shape: bf16[64,32], index: 5, kind: input, shape index: {}]
  %s6 = inlined_call_operand.vmem [shape: f32[1,32], index: 6, kind: input, shape index: {}]
  %s7 = inlined_call_operand.hbm [shape: bf16[32,32], index: 7, kind: input, shape index: {}]
  %s8 = inlined_call_operand.hbm [shape: f32[1,32], index: 8, kind: input, shape index: {}]
  %s9 = inlined_call_operand.hbm [shape: f32[1,32], index: 9, kind: input, shape index: {}]
  %s10 = inlined_call_operand.vmem [shape: f32[1,32], index: 10, kind: input, shape index: {}]
  %s11 = inlined_call_operand.hbm [shape: bf16[32,64], index: 11, kind: input, shape index: {}]
  %s12 = inlined_call_operand.vmem [shape: f32[1,64], index: 12, kind: input, shape index: {}]
  %s13 = inlined_call_operand.vmem [shape: bf16[64,32], index: 13, kind: input, shape index: {}]
  %s14 = inlined_call_operand.vmem [shape: f32[1,32], index: 14, kind: input, shape index: {}]
  %s15 = inlined_call_operand.vmem [shape: f32[1,32], index: 15, kind: input, shape index: {}]
  %s16 = inlined_call_operand.vmem [shape: f32[1,32], index: 16, kind: input, shape index: {}]
  %s17 = inlined_call_operand.vmem [shape: bf16[2,8], index: 17, kind: input, shape index: {}]
  %s18 = inlined_call_operand.vmem [shape: bf16[64,128], index: 18, kind: input, shape index: {}]
  %s19 = inlined_call_operand.vmem [shape: f32[1,128], index: 19, kind: input, shape index: {}]
  %s20 = inlined_call_operand.hbm [shape: f32[1,2,128], index: 20, kind: output, shape index: {0}]
  %s21 = inlined_call_operand.hbm [shape: f32[8,32], index: 21, kind: output, shape index: {1}]
  %22 = xla_tuple %s20, %s21
  %s23 = sld [smem:[#allocation0]]
  $region126: #{tpu_custom_call.1} parent=0
    _
  %s25 = ssub.s32 1, %s23
  %s26 = scalar_select 0, %s25, %s23
  $region1: #{tpu_custom_call.1} parent=0
    #allocation2 [shape = 'u8[4096]{0}', space=vmem, size = 0x1000, scoped, tag = 'input window, operand 0, single buffered']
    #allocation3 [shape = 's32[1]{0}', space=sflag, size = 0x4, scoped, tag = 'scoped memory for tpu_custom_call.1']
    #allocation4 [shape = 's32[1]{0}', space=sflag, size = 0x4, scoped, tag = 'scoped memory for tpu_custom_call.1']
    #allocation5 [shape = 'u8[2048]{0}', space=vmem, size = 0x800, scoped, tag = 'input window, operand 2, single buffered']
    #allocation6 [shape = 's32[1]{0}', space=sflag, size = 0x4, scoped, tag = 'scoped memory for tpu_custom_call.1']
    #allocation7 [shape = 'u8[8192]{0}', space=vmem, size = 0x2000, scoped, tag = 'input window, operand 3, single buffered']
    #allocation8 [shape = 'u8[8192]{0}', space=vmem, size = 0x2000, scoped, tag = 'input window, operand 7, single buffered']
    #allocation9 [shape = 's32[1]{0}', space=sflag, size = 0x4, scoped, tag = 'scoped memory for tpu_custom_call.1']
    #allocation10 [shape = 'u8[512]{0}', space=vmem, size = 0x400, scoped, tag = 'input window, operand 8, single buffered']
    #allocation11 [shape = 'u8[512]{0}', space=vmem, size = 0x400, scoped, tag = 'input window, operand 9, single buffered']
    #allocation12 [shape = 's32[1]{0}', space=sflag, size = 0x4, scoped, tag = 'scoped memory for tpu_custom_call.1']
    #allocation13 [shape = 'u8[8192]{0}', space=vmem, size = 0x2000, scoped, tag = 'input window, operand 11, single buffered']
    #allocation14 [shape = 'u8[1024]{0}', space=vmem, size = 0x400, scoped, tag = 'output window, operand 0, single buffered']
    #allocation15 [shape = 'u8[4096]{0}', space=vmem, size = 0x1000, scoped, tag = 'output window, operand 1, single buffered']
    #allocation16 [shape = 's32[1]{0}', space=sflag, size = 0x4, scoped, tag = 'scoped memory for tpu_custom_call.1']
    %27 = vsyncpa [#allocation3], 0
    %28 = vsyncpa [#allocation6], 0
    %29 = vsyncpa [#allocation9], 0
    %30 = vsyncpa [#allocation12], 0
    %31 = vsyncpa [#allocation4], 0
    %32 = vsyncpa [#allocation16], 0
    // Predicated region
    $region2: #{tpu_custom_call.1} parent=1 // pred_check
      _
    $region3: #{tpu_custom_call.1} parent=1 // pred_check_branch
      %34 = sbr.rel (0) target = $region5
    $region4: #{tpu_custom_call.1} parent=1 // pred_region
      %s36 = ssub.s32 128, 128
      %37 = vsyncadd [#allocation3], %s36
      %s39 = sshll.u32 [#allocation2], 4
      %s40 = int_to_ptr.vmem [resolvable:$true] %s39
      %42 = dma.hbm_to_vmem [thread:$0]  %s0, 128, %s40, [#allocation3]
    $region5: #{tpu_custom_call.1} parent=1 // pred_fallthru
      _
    // Predicated region
    $region6: #{tpu_custom_call.1} parent=1 // pred_check
      _
    $region7: #{tpu_custom_call.1} parent=1 // pred_check_branch
      %44 = sbr.rel (0) target = $region9
    $region8: #{tpu_custom_call.1} parent=1 // pred_region
      _
    $region9: #{tpu_custom_call.1} parent=1 // pred_fallthru
      _
    // Predicated region
    $region10: #{tpu_custom_call.1} parent=1 // pred_check
      _
    $region11: #{tpu_custom_call.1} parent=1 // pred_check_branch
      %46 = sbr.rel (0) target = $region13
    $region12: #{tpu_custom_call.1} parent=1 // pred_region
      %s48 = ssub.s32 64, 64
      %49 = vsyncadd [#allocation6], %s48
      %s51 = sshll.u32 [#allocation5], 4
      %s52 = int_to_ptr.vmem [resolvable:$true] %s51
      %54 = dma.hbm_to_vmem [thread:$0]  %s2, 64, %s52, [#allocation6]
    $region13: #{tpu_custom_call.1} parent=1 // pred_fallthru
      _
    // Predicated region
    $region14: #{tpu_custom_call.1} parent=1 // pred_check
      _
    $region15: #{tpu_custom_call.1} parent=1 // pred_check_branch
      %56 = sbr.rel (0) target = $region17
    $region16: #{tpu_custom_call.1} parent=1 // pred_region
      %s58 = ssub.s32 256, 256
      %59 = vsyncadd [#allocation6], %s58
      %s60 = sshll.u32 [#allocation7], 4
      %s61 = int_to_ptr.vmem [resolvable:$true] %s60
      %66 = dma.hbm_to_vmem [thread:$0]  %s3, 256, %s61, [#allocation6], 64, 64, 4
    $region17: #{tpu_custom_call.1} parent=1 // pred_fallthru
      _
    // Predicated region
    $region18: #{tpu_custom_call.1} parent=1 // pred_check
      _
    $region19: #{tpu_custom_call.1} parent=1 // pred_check_branch
      %68 = sbr.rel (0) target = $region21
    $region20: #{tpu_custom_call.1} parent=1 // pred_region
      _
    $region21: #{tpu_custom_call.1} parent=1 // pred_fallthru
      _
    // Predicated region
    $region22: #{tpu_custom_call.1} parent=1 // pred_check
      _
    $region23: #{tpu_custom_call.1} parent=1 // pred_check_branch
      %70 = sbr.rel (0) target = $region25
    $region24: #{tpu_custom_call.1} parent=1 // pred_region
      _
    $region25: #{tpu_custom_call.1} parent=1 // pred_fallthru
      _
    // Predicated region
    $region26: #{tpu_custom_call.1} parent=1 // pred_check
      _
    $region27: #{tpu_custom_call.1} parent=1 // pred_check_branch
      %72 = sbr.rel (0) target = $region29
    $region28: #{tpu_custom_call.1} parent=1 // pred_region
      _
    $region29: #{tpu_custom_call.1} parent=1 // pred_fallthru
      _
    // Predicated region
    $region30: #{tpu_custom_call.1} parent=1 // pred_check
      _
    $region31: #{tpu_custom_call.1} parent=1 // pred_check_branch
      %74 = sbr.rel (0) target = $region33
    $region32: #{tpu_custom_call.1} parent=1 // pred_region
      %s76 = ssub.s32 256, 256
      %77 = vsyncadd [#allocation9], %s76
      %s78 = sshll.u32 [#allocation8], 4
      %s79 = int_to_ptr.vmem [resolvable:$true] %s78
      %84 = dma.hbm_to_vmem [thread:$0]  %s7, 256, %s79, [#allocation9], 64, 64, 4
    $region33: #{tpu_custom_call.1} parent=1 // pred_fallthru
      _
    // Predicated region
    $region34: #{tpu_custom_call.1} parent=1 // pred_check
      _
    $region35: #{tpu_custom_call.1} parent=1 // pred_check_branch
      %86 = sbr.rel (0) target = $region37
    $region36: #{tpu_custom_call.1} parent=1 // pred_region
      %s88 = ssub.s32 16, 16
      %89 = vsyncadd [#allocation9], %s88
      %s91 = sshll.u32 [#allocation10], 4
      %s92 = int_to_ptr.vmem [resolvable:$true] %s91
      %94 = dma.hbm_to_vmem [thread:$0]  %s8, 16, %s92, [#allocation9]
    $region37: #{tpu_custom_call.1} parent=1 // pred_fallthru
      _
    // Predicated region
    $region38: #{tpu_custom_call.1} parent=1 // pred_check
      _
    $region39: #{tpu_custom_call.1} parent=1 // pred_check_branch
      %96 = sbr.rel (0) target = $region41
    $region40: #{tpu_custom_call.1} parent=1 // pred_region
      %s98 = ssub.s32 16, 16
      %99 = vsyncadd [#allocation12], %s98
      %s101 = sshll.u32 [#allocation11], 4
      %s102 = int_to_ptr.vmem [resolvable:$true] %s101
      %104 = dma.hbm_to_vmem [thread:$0]  %s9, 16, %s102, [#allocation12]
    $region41: #{tpu_custom_call.1} parent=1 // pred_fallthru
      _
    // Predicated region
    $region42: #{tpu_custom_call.1} parent=1 // pred_check
      _
    $region43: #{tpu_custom_call.1} parent=1 // pred_check_branch
      %106 = sbr.rel (0) target = $region45
    $region44: #{tpu_custom_call.1} parent=1 // pred_region
      _
    $region45: #{tpu_custom_call.1} parent=1 // pred_fallthru
      _
    // Predicated region
    $region46: #{tpu_custom_call.1} parent=1 // pred_check
      _
    $region47: #{tpu_custom_call.1} parent=1 // pred_check_branch
      %108 = sbr.rel (0) target = $region49
    $region48: #{tpu_custom_call.1} parent=1 // pred_region
      %s110 = ssub.s32 256, 256
      %111 = vsyncadd [#allocation12], %s110
      %s112 = sshll.u32 [#allocation13], 4
      %s113 = int_to_ptr.vmem [resolvable:$true] %s112
      %118 = dma.hbm_to_vmem [thread:$0]  %s11, 256, %s113, [#allocation12], 64, 64, 4
    $region49: #{tpu_custom_call.1} parent=1 // pred_fallthru
      _
    // Predicated region
    $region50: #{tpu_custom_call.1} parent=1 // pred_check
      _
    $region51: #{tpu_custom_call.1} parent=1 // pred_check_branch
      %120 = sbr.rel (0) target = $region53
    $region52: #{tpu_custom_call.1} parent=1 // pred_region
      _
    $region53: #{tpu_custom_call.1} parent=1 // pred_fallthru
      _
    // Predicated region
    $region54: #{tpu_custom_call.1} parent=1 // pred_check
      _
    $region55: #{tpu_custom_call.1} parent=1 // pred_check_branch
      %122 = sbr.rel (0) target = $region57
    $region56: #{tpu_custom_call.1} parent=1 // pred_region
      _
    $region57: #{tpu_custom_call.1} parent=1 // pred_fallthru
      _
    // Predicated region
    $region58: #{tpu_custom_call.1} parent=1 // pred_check
      _
    $region59: #{tpu_custom_call.1} parent=1 // pred_check_branch
      %124 = sbr.rel (0) target = $region61
    $region60: #{tpu_custom_call.1} parent=1 // pred_region
      _
    $region61: #{tpu_custom_call.1} parent=1 // pred_fallthru
      _
    // Predicated region
    $region62: #{tpu_custom_call.1} parent=1 // pred_check
      _
    $region63: #{tpu_custom_call.1} parent=1 // pred_check_branch
      %126 = sbr.rel (0) target = $region65
    $region64: #{tpu_custom_call.1} parent=1 // pred_region
      _
    $region65: #{tpu_custom_call.1} parent=1 // pred_fallthru
      _
    // Predicated region
    $region66: #{tpu_custom_call.1} parent=1 // pred_check
      _
    $region67: #{tpu_custom_call.1} parent=1 // pred_check_branch
      %128 = sbr.rel (0) target = $region69
    $region68: #{tpu_custom_call.1} parent=1 // pred_region
      _
    $region69: #{tpu_custom_call.1} parent=1 // pred_fallthru
      _
    // Predicated region
    $region70: #{tpu_custom_call.1} parent=1 // pred_check
      _
    $region71: #{tpu_custom_call.1} parent=1 // pred_check_branch
      %130 = sbr.rel (0) target = $region73
    $region72: #{tpu_custom_call.1} parent=1 // pred_region
      _
    $region73: #{tpu_custom_call.1} parent=1 // pred_fallthru
      _
    // Predicated region
    $region74: #{tpu_custom_call.1} parent=1 // pred_check
      _
    $region75: #{tpu_custom_call.1} parent=1 // pred_check_branch
      %132 = sbr.rel (0) target = $region77
    $region76: #{tpu_custom_call.1} parent=1 // pred_region
      _
    $region77: #{tpu_custom_call.1} parent=1 // pred_fallthru
      _
    // Predicated region
    $region78: #{tpu_custom_call.1} parent=1 // pred_check
      _
    $region79: #{tpu_custom_call.1} parent=1 // pred_check_branch
      %134 = sbr.rel (0) target = $region81
    $region80: #{tpu_custom_call.1} parent=1 // pred_region
      _
    $region81: #{tpu_custom_call.1} parent=1 // pred_fallthru
      _
    // Predicated region
    $region82: #{tpu_custom_call.1} parent=1 // pred_check
      _
    $region83: #{tpu_custom_call.1} parent=1 // pred_check_branch
      %136 = sbr.rel (0) target = $region85
    $region84: #{tpu_custom_call.1} parent=1 // pred_region
      %137 = dma.done [#allocation3], 128
    $region85: #{tpu_custom_call.1} parent=1 // pred_fallthru
      _
    // Predicated region
    $region86: #{tpu_custom_call.1} parent=1 // pred_check
      _
    $region87: #{tpu_custom_call.1} parent=1 // pred_check_branch
      %139 = sbr.rel (0) target = $region89
    $region88: #{tpu_custom_call.1} parent=1 // pred_region
      %140 = dma.done [#allocation6], 64
    $region89: #{tpu_custom_call.1} parent=1 // pred_fallthru
      _
    // Predicated region
    $region90: #{tpu_custom_call.1} parent=1 // pred_check
      _
    $region91: #{tpu_custom_call.1} parent=1 // pred_check_branch
      %142 = sbr.rel (0) target = $region93
    $region92: #{tpu_custom_call.1} parent=1 // pred_region
      %143 = dma.done [#allocation6], 256
    $region93: #{tpu_custom_call.1} parent=1 // pred_fallthru
      _
    // Predicated region
    $region94: #{tpu_custom_call.1} parent=1 // pred_check
      _
    $region95: #{tpu_custom_call.1} parent=1 // pred_check_branch
      %145 = sbr.rel (0) target = $region97
    $region96: #{tpu_custom_call.1} parent=1 // pred_region
      %146 = dma.done [#allocation9], 256
    $region97: #{tpu_custom_call.1} parent=1 // pred_fallthru
      _
    // Predicated region
    $region98: #{tpu_custom_call.1} parent=1 // pred_check
      _
    $region99: #{tpu_custom_call.1} parent=1 // pred_check_branch
      %148 = sbr.rel (0) target = $region101
    $region100: #{tpu_custom_call.1} parent=1 // pred_region
      %149 = dma.done [#allocation9], 16
    $region101: #{tpu_custom_call.1} parent=1 // pred_fallthru
      _
    // Predicated region
    $region102: #{tpu_custom_call.1} parent=1 // pred_check
      _
    $region103: #{tpu_custom_call.1} parent=1 // pred_check_branch
      %151 = sbr.rel (0) target = $region105
    $region104: #{tpu_custom_call.1} parent=1 // pred_region
      %152 = dma.done [#allocation12], 16
    $region105: #{tpu_custom_call.1} parent=1 // pred_fallthru
      _
    // Predicated region
    $region106: #{tpu_custom_call.1} parent=1 // pred_check
      _
    $region107: #{tpu_custom_call.1} parent=1 // pred_check_branch
      %154 = sbr.rel (0) target = $region109
    $region108: #{tpu_custom_call.1} parent=1 // pred_region
      %155 = dma.done [#allocation12], 256
    $region109: #{tpu_custom_call.1} parent=1 // pred_fallthru
      _
    %v157 = vld [vmem:[#allocation2] sm:$0xff]
    %v158 = vpack.c.bf16 %v157, %v157
    %v159 = vld [vmem:[#allocation5] sm:$0xf]
    %v160 = vlaneseq
    %v161 = vshrl.u32 %v160, 7
    %vm162 = vcmp.lt.s32.totalorder %v161, 0
    %v163 = vsub.s32 0, %v161
    %v164 = vsel %vm162, %v163, %v161
    %v165 = vshrl.u32 %v164, 2
    %v166 = vand.u32 %v164, 3
    %v167 = vsub.s32 0, %v166
    %v168 = vsel %vm162, %v167, %v166
    %vm169 = vcmp.ne.s32.totalorder %v168, 0
    %vm170 = vcmp.lt.s32.totalorder %v168, 0
    %vm171 = vmand %vm170, %vm169
    %v172 = vadd.s32 %v168, 4
    %v173 = vsel %vm171, %v172, %v168
    %v174 = vld [vmem:[%s1] sm:$0xf]
    %v175 = vld [vmem:[%s1 + $0x4] sm:$0xf]
    %v176 = vld [vmem:[%s1 + $0x8] sm:$0xf]
    %v177 = vld [vmem:[%s1 + $0xc] sm:$0xf]
    %v178 = vlaneseq
    %v179 = vshrl.u32 %v178, 7
    %v180 = vsub.s32 0, %v179
    %v181 = vrot.slane %v159, %v180
    %v186 = vunpack.c.l.b16 %v174
    %v187 = vunpack.c.l.b16 %v175
    %v188 = vunpack.c.l.b16 %v176
    %v189 = vunpack.c.l.b16 %v177
    %v190 = vpack.c.b16 %v187, %v186
    %v191 = vpack.c.b16 %v189, %v188
    %vm194 = vcmask 261120
    %v196 = vsel %vm194, %v158, 0
    %198 = vmatprep.subr.bf16.mxu0 0
    %199 = vmatpush1.bf16.msra.mxu0 %v190
    %200 = vmatprep.subr.bf16.mxu0 0
    %201 = vmatpush1.bf16.msra.mxu0 %v191
    %202 = vmatprep.subr.bf16.mxu0 0
    %203 = vmatpush1.bf16.msra.mxu0 0
    %204 = vmatprep.subr.bf16.mxu0 0
    %205 = vmatpush1.bf16.msra.mxu0 0
    %206 = vmatprep.subr.bf16.mxu0 0
    %207 = vmatpush1.bf16.msra.mxu0 0
    %208 = vmatprep.subr.bf16.mxu0 0
    %209 = vmatpush1.bf16.msra.mxu0 0
    %210 = vmatprep.subr.bf16.mxu0 0
    %211 = vmatpush1.bf16.msra.mxu0 0
    %212 = vmatprep.subr.bf16.mxu0 0
    %213 = vmatpush1.bf16.msra.mxu0 0
    %214 = vmatprep.subr.bf16.mxu0 0
    %215 = vmatpush1.bf16.msra.mxu0 0
    %216 = vmatprep.subr.bf16.mxu0 0
    %217 = vmatpush1.bf16.msra.mxu0 0
    %218 = vmatprep.subr.bf16.mxu0 0
    %219 = vmatpush1.bf16.msra.mxu0 0
    %220 = vmatprep.subr.bf16.mxu0 0
    %221 = vmatpush1.bf16.msra.mxu0 0
    %222 = vmatprep.subr.bf16.mxu0 0
    %223 = vmatpush1.bf16.msra.mxu0 0
    %224 = vmatprep.subr.bf16.mxu0 0
    %225 = vmatpush1.bf16.msra.mxu0 0
    %226 = vmatprep.subr.bf16.mxu0 0
    %227 = vmatpush1.bf16.msra.mxu0 0
    %228 = vmatprep.subr.bf16.mxu0 0
    %229 = vmatpush1.bf16.msra.mxu0 0
    %230 = vmatprep.mubr.bf16.mxu0 0
    %231 = vmatmul.mubr.bf16.gmra.mrb[0].mxu0 %v196
    %v232 = vpop.f32.mrb[0].mxu0
    %v233 = vadd.f32 %v181, %v232
    %v234 = vpop.f32.mrb[0].mxu0
    %v235 = vpop.f32.mrb[0].mxu0
    %v236 = vpop.f32.mrb[0].mxu0
    %237 = vdwg.mxu0
    %s238 = scalar_lea.vmem %s1, 16
    %v239 = vld [vmem:[%s238] sm:$0xf]
    %v240 = vld [vmem:[%s238 + $0x4] sm:$0xf]
    %v241 = vld [vmem:[%s238 + $0x8] sm:$0xf]
    %v242 = vld [vmem:[%s238 + $0xc] sm:$0xf]
    %v243 = vlaneseq
    %v244 = vshrl.u32 %v243, 7
    %v245 = vsub.s32 1, %v244
    %v246 = vrot.slane %v159, %v245
    %v251 = vunpack.c.l.b16 %v239
    %v252 = vunpack.c.l.b16 %v240
    %v253 = vunpack.c.l.b16 %v241
    %v254 = vunpack.c.l.b16 %v242
    %v255 = vpack.c.b16 %v252, %v251
    %v256 = vpack.c.b16 %v254, %v253
    %259 = vmatprep.subr.bf16.mxu0 0
    %260 = vmatpush1.bf16.msra.mxu0 %v255
    %261 = vmatprep.subr.bf16.mxu0 0
    %262 = vmatpush1.bf16.msra.mxu0 %v256
    %263 = vmatprep.subr.bf16.mxu0 0
    %264 = vmatpush1.bf16.msra.mxu0 0
    %265 = vmatprep.subr.bf16.mxu0 0
    %266 = vmatpush1.bf16.msra.mxu0 0
    %267 = vmatprep.subr.bf16.mxu0 0
    %268 = vmatpush1.bf16.msra.mxu0 0
    %269 = vmatprep.subr.bf16.mxu0 0
    %270 = vmatpush1.bf16.msra.mxu0 0
    %271 = vmatprep.subr.bf16.mxu0 0
    %272 = vmatpush1.bf16.msra.mxu0 0
    %273 = vmatprep.subr.bf16.mxu0 0
    %274 = vmatpush1.bf16.msra.mxu0 0
    %275 = vmatprep.subr.bf16.mxu0 0
    %276 = vmatpush1.bf16.msra.mxu0 0
    %277 = vmatprep.subr.bf16.mxu0 0
    %278 = vmatpush1.bf16.msra.mxu0 0
    %279 = vmatprep.subr.bf16.mxu0 0
    %280 = vmatpush1.bf16.msra.mxu0 0
    %281 = vmatprep.subr.bf16.mxu0 0
    %282 = vmatpush1.bf16.msra.mxu0 0
    %283 = vmatprep.subr.bf16.mxu0 0
    %284 = vmatpush1.bf16.msra.mxu0 0
    %285 = vmatprep.subr.bf16.mxu0 0
    %286 = vmatpush1.bf16.msra.mxu0 0
    %287 = vmatprep.subr.bf16.mxu0 0
    %288 = vmatpush1.bf16.msra.mxu0 0
    %289 = vmatprep.subr.bf16.mxu0 0
    %290 = vmatpush1.bf16.msra.mxu0 0
    %291 = vmatprep.mubr.bf16.mxu0 0
    %292 = vmatmul.mubr.bf16.gmra.mrb[0].mxu0 %v196
    %v293 = vpop.f32.mrb[0].mxu0
    %v294 = vadd.f32 %v246, %v293
    %v295 = vpop.f32.mrb[0].mxu0
    %v296 = vpop.f32.mrb[0].mxu0
    %v297 = vpop.f32.mrb[0].mxu0
    %298 = vdwg.mxu0
    %vm299 = vcmp.eq.s32.totalorder %v173, 1
    %v300 = vsel %vm299, 1, 0
    %vm301 = vcmp.eq.s32.totalorder %v300, 1
    %v302 = vsel %vm301, %v294, %v233
    %s303 = scalar_lea.vmem %s1, 32
    %v304 = vld [vmem:[%s303] sm:$0xf]
    %v305 = vld [vmem:[%s303 + $0x4] sm:$0xf]
    %v306 = vld [vmem:[%s303 + $0x8] sm:$0xf]
    %v307 = vld [vmem:[%s303 + $0xc] sm:$0xf]
    %v308 = vlaneseq
    %v309 = vshrl.u32 %v308, 7
    %v310 = vsub.s32 2, %v309
    %v311 = vrot.slane %v159, %v310
    %v316 = vunpack.c.l.b16 %v304
    %v317 = vunpack.c.l.b16 %v305
    %v318 = vunpack.c.l.b16 %v306
    %v319 = vunpack.c.l.b16 %v307
    %v320 = vpack.c.b16 %v317, %v316
    %v321 = vpack.c.b16 %v319, %v318
    %324 = vmatprep.subr.bf16.mxu0 0
    %325 = vmatpush1.bf16.msra.mxu0 %v320
    %326 = vmatprep.subr.bf16.mxu0 0
    %327 = vmatpush1.bf16.msra.mxu0 %v321
    %328 = vmatprep.subr.bf16.mxu0 0
    %329 = vmatpush1.bf16.msra.mxu0 0
    %330 = vmatprep.subr.bf16.mxu0 0
    %331 = vmatpush1.bf16.msra.mxu0 0
    %332 = vmatprep.subr.bf16.mxu0 0
    %333 = vmatpush1.bf16.msra.mxu0 0
    %334 = vmatprep.subr.bf16.mxu0 0
    %335 = vmatpush1.bf16.msra.mxu0 0
    %336 = vmatprep.subr.bf16.mxu0 0
    %337 = vmatpush1.bf16.msra.mxu0 0
    %338 = vmatprep.subr.bf16.mxu0 0
    %339 = vmatpush1.bf16.msra.mxu0 0
    %340 = vmatprep.subr.bf16.mxu0 0
    %341 = vmatpush1.bf16.msra.mxu0 0
    %342 = vmatprep.subr.bf16.mxu0 0
    %343 = vmatpush1.bf16.msra.mxu0 0
    %344 = vmatprep.subr.bf16.mxu0 0
    %345 = vmatpush1.bf16.msra.mxu0 0
    %346 = vmatprep.subr.bf16.mxu0 0
    %347 = vmatpush1.bf16.msra.mxu0 0
    %348 = vmatprep.subr.bf16.mxu0 0
    %349 = vmatpush1.bf16.msra.mxu0 0
    %350 = vmatprep.subr.bf16.mxu0 0
    %351 = vmatpush1.bf16.msra.mxu0 0
    %352 = vmatprep.subr.bf16.mxu0 0
    %353 = vmatpush1.bf16.msra.mxu0 0
    %354 = vmatprep.subr.bf16.mxu0 0
    %355 = vmatpush1.bf16.msra.mxu0 0
    %356 = vmatprep.mubr.bf16.mxu0 0
    %357 = vmatmul.mubr.bf16.gmra.mrb[0].mxu0 %v196
    %v358 = vpop.f32.mrb[0].mxu0
    %v359 = vadd.f32 %v311, %v358
    %v360 = vpop.f32.mrb[0].mxu0
    %v361 = vpop.f32.mrb[0].mxu0
    %v362 = vpop.f32.mrb[0].mxu0
    %363 = vdwg.mxu0
    %vm364 = vcmp.eq.s32.totalorder %v173, 2
    %v365 = vsel %vm364, 1, 0
    %vm366 = vcmp.eq.s32.totalorder %v365, 1
    %v367 = vsel %vm366, %v359, %v302
    %s368 = scalar_lea.vmem %s1, 48
    %v369 = vld [vmem:[%s368] sm:$0xf]
    %v370 = vld [vmem:[%s368 + $0x4] sm:$0xf]
    %v371 = vld [vmem:[%s368 + $0x8] sm:$0xf]
    %v372 = vld [vmem:[%s368 + $0xc] sm:$0xf]
    %v373 = vlaneseq
    %v374 = vshrl.u32 %v373, 7
    %v375 = vsub.s32 3, %v374
    %v376 = vrot.slane %v159, %v375
    %v381 = vunpack.c.l.b16 %v369
    %v382 = vunpack.c.l.b16 %v370
    %v383 = vunpack.c.l.b16 %v371
    %v384 = vunpack.c.l.b16 %v372
    %v385 = vpack.c.b16 %v382, %v381
    %v386 = vpack.c.b16 %v384, %v383
    %389 = vmatprep.subr.bf16.mxu0 0
    %390 = vmatpush1.bf16.msra.mxu0 %v385
    %391 = vmatprep.subr.bf16.mxu0 0
    %392 = vmatpush1.bf16.msra.mxu0 %v386
    %393 = vmatprep.subr.bf16.mxu0 0
    %394 = vmatpush1.bf16.msra.mxu0 0
    %395 = vmatprep.subr.bf16.mxu0 0
    %396 = vmatpush1.bf16.msra.mxu0 0
    %397 = vmatprep.subr.bf16.mxu0 0
    %398 = vmatpush1.bf16.msra.mxu0 0
    %399 = vmatprep.subr.bf16.mxu0 0
    %400 = vmatpush1.bf16.msra.mxu0 0
    %401 = vmatprep.subr.bf16.mxu0 0
    %402 = vmatpush1.bf16.msra.mxu0 0
    %403 = vmatprep.subr.bf16.mxu0 0
    %404 = vmatpush1.bf16.msra.mxu0 0
    %405 = vmatprep.subr.bf16.mxu0 0
    %406 = vmatpush1.bf16.msra.mxu0 0
    %407 = vmatprep.subr.bf16.mxu0 0
    %408 = vmatpush1.bf16.msra.mxu0 0
    %409 = vmatprep.subr.bf16.mxu0 0
    %410 = vmatpush1.bf16.msra.mxu0 0
    %411 = vmatprep.subr.bf16.mxu0 0
    %412 = vmatpush1.bf16.msra.mxu0 0
    %413 = vmatprep.subr.bf16.mxu0 0
    %414 = vmatpush1.bf16.msra.mxu0 0
    %415 = vmatprep.subr.bf16.mxu0 0
    %416 = vmatpush1.bf16.msra.mxu0 0
    %417 = vmatprep.subr.bf16.mxu0 0
    %418 = vmatpush1.bf16.msra.mxu0 0
    %419 = vmatprep.subr.bf16.mxu0 0
    %420 = vmatpush1.bf16.msra.mxu0 0
    %421 = vmatprep.mubr.bf16.mxu0 0
    %422 = vmatmul.mubr.bf16.gmra.mrb[0].mxu0 %v196
    %v423 = vpop.f32.mrb[0].mxu0
    %v424 = vadd.f32 %v376, %v423
    %v425 = vpop.f32.mrb[0].mxu0
    %v426 = vpop.f32.mrb[0].mxu0
    %v427 = vpop.f32.mrb[0].mxu0
    %428 = vdwg.mxu0
    %vm429 = vcmp.eq.s32.totalorder %v173, 3
    %v430 = vsel %vm429, 1, 0
    %vm431 = vcmp.eq.s32.totalorder %v430, 1
    %v432 = vsel %vm431, %v424, %v367
    %v433 = vsub.f32 %v157, %v432
    %v434 = vpack.c.bf16 %v433, %v433
    %v435 = vld [vmem:[#allocation7] sm:$0xf]
    %v436 = vld [vmem:[#allocation7 + $0x4] sm:$0xf]
    %v437 = vld [vmem:[#allocation7 + $0x8] sm:$0xf]
    %v438 = vld [vmem:[#allocation7 + $0xc] sm:$0xf]
    %v439 = vld [vmem:[%s4] sm:$0x1]
    %v441 = vlaneseq
    %v442 = vshrl.u32 %v441, 7
    %v443 = vsub.s32 0, %v442
    %v444 = vrot.slane %v439, %v443
    %v450 = vunpack.c.l.b16 %v435
    %v451 = vunpack.c.l.b16 %v436
    %v452 = vunpack.c.l.b16 %v437
    %v453 = vunpack.c.l.b16 %v438
    %v454 = vpack.c.b16 %v451, %v450
    %v455 = vpack.c.b16 %v453, %v452
    %v459 = vsel %vm194, %v434, 0
    %461 = vmatprep.subr.bf16.mxu0 0
    %462 = vmatpush1.bf16.msra.mxu0 %v454
    %463 = vmatprep.subr.bf16.mxu0 0
    %464 = vmatpush1.bf16.msra.mxu0 %v455
    %465 = vmatprep.subr.bf16.mxu0 0
    %466 = vmatpush1.bf16.msra.mxu0 0
    %467 = vmatprep.subr.bf16.mxu0 0
    %468 = vmatpush1.bf16.msra.mxu0 0
    %469 = vmatprep.subr.bf16.mxu0 0
    %470 = vmatpush1.bf16.msra.mxu0 0
    %471 = vmatprep.subr.bf16.mxu0 0
    %472 = vmatpush1.bf16.msra.mxu0 0
    %473 = vmatprep.subr.bf16.mxu0 0
    %474 = vmatpush1.bf16.msra.mxu0 0
    %475 = vmatprep.subr.bf16.mxu0 0
    %476 = vmatpush1.bf16.msra.mxu0 0
    %477 = vmatprep.subr.bf16.mxu0 0
    %478 = vmatpush1.bf16.msra.mxu0 0
    %479 = vmatprep.subr.bf16.mxu0 0
    %480 = vmatpush1.bf16.msra.mxu0 0
    %481 = vmatprep.subr.bf16.mxu0 0
    %482 = vmatpush1.bf16.msra.mxu0 0
    %483 = vmatprep.subr.bf16.mxu0 0
    %484 = vmatpush1.bf16.msra.mxu0 0
    %485 = vmatprep.subr.bf16.mxu0 0
    %486 = vmatpush1.bf16.msra.mxu0 0
    %487 = vmatprep.subr.bf16.mxu0 0
    %488 = vmatpush1.bf16.msra.mxu0 0
    %489 = vmatprep.subr.bf16.mxu0 0
    %490 = vmatpush1.bf16.msra.mxu0 0
    %491 = vmatprep.subr.bf16.mxu0 0
    %492 = vmatpush1.bf16.msra.mxu0 0
    %493 = vmatprep.mubr.bf16.mxu0 0
    %494 = vmatmul.mubr.bf16.gmra.mrb[0].mxu0 %v459
    %v495 = vpop.f32.mrb[0].mxu0
    %v496 = vadd.f32 %v444, %v495
    %v497 = vpop.f32.mrb[0].mxu0
    %v498 = vpop.f32.mrb[0].mxu0
    %v499 = vpop.f32.mrb[0].mxu0
    %500 = vdwg.mxu0
    %v501 = vmul.f32 %v496, 0.5
    %v502 = vmul.f32 %v496, %v496
    %v503 = vmul.f32 %v502, %v496
    %v504 = vmul.f32 %v503, 0.044715
    %v505 = vadd.f32 %v496, %v504
    %v506 = vmul.f32 %v505, 0.7978846
    %v507 = vtanh.pop %v506
    %v508 = vadd.f32 %v507, 1.0
    %v509 = vmul.f32 %v501, %v508
    %v510 = vpack.c.bf16 %v509, %v509
    %v511 = vld [vmem:[%s5] sm:$0xf]
    %v512 = vld [vmem:[%s5 + $0x4] sm:$0xf]
    %v513 = vld [vmem:[%s5 + $0x8] sm:$0xf]
    %v514 = vld [vmem:[%s5 + $0xc] sm:$0xf]
    %v515 = vld [vmem:[%s5 + $0x10] sm:$0xf]
    %v516 = vld [vmem:[%s5 + $0x14] sm:$0xf]
    %v517 = vld [vmem:[%s5 + $0x18] sm:$0xf]
    %v518 = vld [vmem:[%s5 + $0x1c] sm:$0xf]
    %v519 = vld [vmem:[%s6] sm:$0x1]
    %v521 = vlaneseq
    %v522 = vshrl.u32 %v521, 7
    %v523 = vsub.s32 0, %v522
    %v524 = vrot.slane %v519, %v523
    %v534 = vunpack.c.l.b16 %v511
    %v535 = vunpack.c.l.b16 %v512
    %v536 = vunpack.c.l.b16 %v513
    %v537 = vunpack.c.l.b16 %v514
    %v538 = vunpack.c.l.b16 %v515
    %v539 = vunpack.c.l.b16 %v516
    %v540 = vunpack.c.l.b16 %v517
    %v541 = vunpack.c.l.b16 %v518
    %v542 = vpack.c.b16 %v535, %v534
    %v543 = vpack.c.b16 %v537, %v536
    %v544 = vpack.c.b16 %v539, %v538
    %v545 = vpack.c.b16 %v541, %v540
    %vm550 = vcmask 523264
    %v552 = vsel %vm550, %v510, 0
    %554 = vmatprep.subr.bf16.mxu0 0
    %555 = vmatpush1.bf16.msra.mxu0 %v542
    %556 = vmatprep.subr.bf16.mxu0 0
    %557 = vmatpush1.bf16.msra.mxu0 %v543
    %558 = vmatprep.subr.bf16.mxu0 0
    %559 = vmatpush1.bf16.msra.mxu0 %v544
    %560 = vmatprep.subr.bf16.mxu0 0
    %561 = vmatpush1.bf16.msra.mxu0 %v545
    %562 = vmatprep.subr.bf16.mxu0 0
    %563 = vmatpush1.bf16.msra.mxu0 0
    %564 = vmatprep.subr.bf16.mxu0 0
    %565 = vmatpush1.bf16.msra.mxu0 0
    %566 = vmatprep.subr.bf16.mxu0 0
    %567 = vmatpush1.bf16.msra.mxu0 0
    %568 = vmatprep.subr.bf16.mxu0 0
    %569 = vmatpush1.bf16.msra.mxu0 0
    %570 = vmatprep.subr.bf16.mxu0 0
    %571 = vmatpush1.bf16.msra.mxu0 0
    %572 = vmatprep.subr.bf16.mxu0 0
    %573 = vmatpush1.bf16.msra.mxu0 0
    %574 = vmatprep.subr.bf16.mxu0 0
    %575 = vmatpush1.bf16.msra.mxu0 0
    %576 = vmatprep.subr.bf16.mxu0 0
    %577 = vmatpush1.bf16.msra.mxu0 0
    %578 = vmatprep.subr.bf16.mxu0 0
    %579 = vmatpush1.bf16.msra.mxu0 0
    %580 = vmatprep.subr.bf16.mxu0 0
    %581 = vmatpush1.bf16.msra.mxu0 0
    %582 = vmatprep.subr.bf16.mxu0 0
    %583 = vmatpush1.bf16.msra.mxu0 0
    %584 = vmatprep.subr.bf16.mxu0 0
    %585 = vmatpush1.bf16.msra.mxu0 0
    %586 = vmatprep.mubr.bf16.mxu0 0
    %587 = vmatmul.mubr.bf16.gmra.mrb[0].mxu0 %v552
    %v588 = vpop.f32.mrb[0].mxu0
    %v589 = vadd.f32 %v524, %v588
    %v590 = vpop.f32.mrb[0].mxu0
    %v591 = vpop.f32.mrb[0].mxu0
    %v592 = vpop.f32.mrb[0].mxu0
    %593 = vdwg.mxu0
    %v594 = vxor.u32 %v589, 2147483648
    %v595 = vmul.f32 %v594, 1.442695
    %v596 = vpow.pop %v595
    %v597 = vadd.f32 %v596, 1.0
    %v598 = vrcp.pop %v597
    %v599 = vmul.f32 1.0, %v598
    %v600 = vmul.f32 %v433, %v599
    %v601 = vpack.c.bf16 %v600, %v600
    %v602 = vld [vmem:[#allocation8] sm:$0xf]
    %v603 = vld [vmem:[#allocation8 + $0x4] sm:$0xf]
    %v604 = vld [vmem:[#allocation8 + $0x8] sm:$0xf]
    %v605 = vld [vmem:[#allocation8 + $0xc] sm:$0xf]
    %v606 = vld [vmem:[#allocation10] sm:$0x1]
    %v608 = vlaneseq
    %v609 = vshrl.u32 %v608, 7
    %v610 = vsub.s32 0, %v609
    %v611 = vrot.slane %v606, %v610
    %v617 = vunpack.c.l.b16 %v602
    %v618 = vunpack.c.l.b16 %v603
    %v619 = vunpack.c.l.b16 %v604
    %v620 = vunpack.c.l.b16 %v605
    %v621 = vpack.c.b16 %v618, %v617
    %v622 = vpack.c.b16 %v620, %v619
    %v626 = vsel %vm194, %v601, 0
    %628 = vmatprep.subr.bf16.mxu0 0
    %629 = vmatpush1.bf16.msra.mxu0 %v621
    %630 = vmatprep.subr.bf16.mxu0 0
    %631 = vmatpush1.bf16.msra.mxu0 %v622
    %632 = vmatprep.subr.bf16.mxu0 0
    %633 = vmatpush1.bf16.msra.mxu0 0
    %634 = vmatprep.subr.bf16.mxu0 0
    %635 = vmatpush1.bf16.msra.mxu0 0
    %636 = vmatprep.subr.bf16.mxu0 0
    %637 = vmatpush1.bf16.msra.mxu0 0
    %638 = vmatprep.subr.bf16.mxu0 0
    %639 = vmatpush1.bf16.msra.mxu0 0
    %640 = vmatprep.subr.bf16.mxu0 0
    %641 = vmatpush1.bf16.msra.mxu0 0
    %642 = vmatprep.subr.bf16.mxu0 0
    %643 = vmatpush1.bf16.msra.mxu0 0
    %644 = vmatprep.subr.bf16.mxu0 0
    %645 = vmatpush1.bf16.msra.mxu0 0
    %646 = vmatprep.subr.bf16.mxu0 0
    %647 = vmatpush1.bf16.msra.mxu0 0
    %648 = vmatprep.subr.bf16.mxu0 0
    %649 = vmatpush1.bf16.msra.mxu0 0
    %650 = vmatprep.subr.bf16.mxu0 0
    %651 = vmatpush1.bf16.msra.mxu0 0
    %652 = vmatprep.subr.bf16.mxu0 0
    %653 = vmatpush1.bf16.msra.mxu0 0
    %654 = vmatprep.subr.bf16.mxu0 0
    %655 = vmatpush1.bf16.msra.mxu0 0
    %656 = vmatprep.subr.bf16.mxu0 0
    %657 = vmatpush1.bf16.msra.mxu0 0
    %658 = vmatprep.subr.bf16.mxu0 0
    %659 = vmatpush1.bf16.msra.mxu0 0
    %660 = vmatprep.mubr.bf16.mxu0 0
    %661 = vmatmul.mubr.bf16.gmra.mrb[0].mxu0 %v626
    %v662 = vpop.f32.mrb[0].mxu0
    %v663 = vadd.f32 %v611, %v662
    %v664 = vpop.f32.mrb[0].mxu0
    %v665 = vpop.f32.mrb[0].mxu0
    %v666 = vpop.f32.mrb[0].mxu0
    %667 = vdwg.mxu0
    %v668 = vadd.f32 %v663, %v433
    %v669 = vld [vmem:[#allocation11] sm:$0x1]
    %v670 = vld [vmem:[%s10] sm:$0x1]
    %v671 = vsel %vm194, %v668, 0.0
    %672 = vadd.xlane.f32.xlu0 %v671
    %v673 = vpop.xlane.xlu0 %672
    %v674 = vrcp.pop 32.0
    %v675 = vmul.f32 %v673, %v674
    %v676 = vsub.f32 %v668, %v675
    %v677 = vmul.f32 %v676, %v676
    %v678 = vsel %vm194, %v677, 0.0
    %679 = vadd.xlane.f32.xlu0 %v678
    %v680 = vpop.xlane.xlu0 %679
    %v681 = vmul.f32 %v680, %v674
    %v682 = vadd.f32 %v681, 1e-06
    %v683 = vrsqrt.pop %v682
    %v684 = vmul.f32 %v676, %v683
    %v686 = vlaneseq
    %v687 = vshrl.u32 %v686, 7
    %v688 = vsub.s32 0, %v687
    %v689 = vrot.slane %v669, %v688
    %v691 = vmul.f32 %v684, %v689
    %v693 = vlaneseq
    %v694 = vshrl.u32 %v693, 7
    %v695 = vsub.s32 0, %v694
    %v696 = vrot.slane %v670, %v695
    %v698 = vadd.f32 %v691, %v696
    %v699 = vpack.c.bf16 %v698, %v698
    %v700 = vld [vmem:[#allocation13] sm:$0xf]
    %v701 = vld [vmem:[#allocation13 + $0x4] sm:$0xf]
    %v702 = vld [vmem:[#allocation13 + $0x8] sm:$0xf]
    %v703 = vld [vmem:[#allocation13 + $0xc] sm:$0xf]
    %v704 = vld [vmem:[%s12] sm:$0x1]
    %v706 = vlaneseq
    %v707 = vshrl.u32 %v706, 7
    %v708 = vsub.s32 0, %v707
    %v709 = vrot.slane %v704, %v708
    %v715 = vunpack.c.l.b16 %v700
    %v716 = vunpack.c.l.b16 %v701
    %v717 = vunpack.c.l.b16 %v702
    %v718 = vunpack.c.l.b16 %v703
    %v719 = vpack.c.b16 %v716, %v715
    %v720 = vpack.c.b16 %v718, %v717
    %v724 = vsel %vm194, %v699, 0
    %726 = vmatprep.subr.bf16.mxu0 0
    %727 = vmatpush1.bf16.msra.mxu0 %v719
    %728 = vmatprep.subr.bf16.mxu0 0
    %729 = vmatpush1.bf16.msra.mxu0 %v720
    %730 = vmatprep.subr.bf16.mxu0 0
    %731 = vmatpush1.bf16.msra.mxu0 0
    %732 = vmatprep.subr.bf16.mxu0 0
    %733 = vmatpush1.bf16.msra.mxu0 0
    %734 = vmatprep.subr.bf16.mxu0 0
    %735 = vmatpush1.bf16.msra.mxu0 0
    %736 = vmatprep.subr.bf16.mxu0 0
    %737 = vmatpush1.bf16.msra.mxu0 0
    %738 = vmatprep.subr.bf16.mxu0 0
    %739 = vmatpush1.bf16.msra.mxu0 0
    %740 = vmatprep.subr.bf16.mxu0 0
    %741 = vmatpush1.bf16.msra.mxu0 0
    %742 = vmatprep.subr.bf16.mxu0 0
    %743 = vmatpush1.bf16.msra.mxu0 0
    %744 = vmatprep.subr.bf16.mxu0 0
    %745 = vmatpush1.bf16.msra.mxu0 0
    %746 = vmatprep.subr.bf16.mxu0 0
    %747 = vmatpush1.bf16.msra.mxu0 0
    %748 = vmatprep.subr.bf16.mxu0 0
    %749 = vmatpush1.bf16.msra.mxu0 0
    %750 = vmatprep.subr.bf16.mxu0 0
    %751 = vmatpush1.bf16.msra.mxu0 0
    %752 = vmatprep.subr.bf16.mxu0 0
    %753 = vmatpush1.bf16.msra.mxu0 0
    %754 = vmatprep.subr.bf16.mxu0 0
    %755 = vmatpush1.bf16.msra.mxu0 0
    %756 = vmatprep.subr.bf16.mxu0 0
    %757 = vmatpush1.bf16.msra.mxu0 0
    %758 = vmatprep.mubr.bf16.mxu0 0
    %759 = vmatmul.mubr.bf16.gmra.mrb[0].mxu0 %v724
    %v760 = vpop.f32.mrb[0].mxu0
    %v761 = vadd.f32 %v709, %v760
    %v762 = vpop.f32.mrb[0].mxu0
    %v763 = vpop.f32.mrb[0].mxu0
    %v764 = vpop.f32.mrb[0].mxu0
    %765 = vdwg.mxu0
    %v766 = vmul.f32 %v761, 0.5
    %v767 = vmul.f32 %v761, %v761
    %v768 = vmul.f32 %v767, %v761
    %v769 = vmul.f32 %v768, 0.044715
    %v770 = vadd.f32 %v761, %v769
    %v771 = vmul.f32 %v770, 0.7978846
    %v772 = vtanh.pop %v771
    %v773 = vadd.f32 %v772, 1.0
    %v774 = vmul.f32 %v766, %v773
    %v775 = vpack.c.bf16 %v774, %v774
    %v776 = vld [vmem:[%s13] sm:$0xf]
    %v777 = vld [vmem:[%s13 + $0x4] sm:$0xf]
    %v778 = vld [vmem:[%s13 + $0x8] sm:$0xf]
    %v779 = vld [vmem:[%s13 + $0xc] sm:$0xf]
    %v780 = vld [vmem:[%s13 + $0x10] sm:$0xf]
    %v781 = vld [vmem:[%s13 + $0x14] sm:$0xf]
    %v782 = vld [vmem:[%s13 + $0x18] sm:$0xf]
    %v783 = vld [vmem:[%s13 + $0x1c] sm:$0xf]
    %v784 = vld [vmem:[%s14] sm:$0x1]
    %v786 = vlaneseq
    %v787 = vshrl.u32 %v786, 7
    %v788 = vsub.s32 0, %v787
    %v789 = vrot.slane %v784, %v788
    %v799 = vunpack.c.l.b16 %v776
    %v800 = vunpack.c.l.b16 %v777
    %v801 = vunpack.c.l.b16 %v778
    %v802 = vunpack.c.l.b16 %v779
    %v803 = vunpack.c.l.b16 %v780
    %v804 = vunpack.c.l.b16 %v781
    %v805 = vunpack.c.l.b16 %v782
    %v806 = vunpack.c.l.b16 %v783
    %v807 = vpack.c.b16 %v800, %v799
    %v808 = vpack.c.b16 %v802, %v801
    %v809 = vpack.c.b16 %v804, %v803
    %v810 = vpack.c.b16 %v806, %v805
    %v816 = vsel %vm550, %v775, 0
    %818 = vmatprep.subr.bf16.mxu0 0
    %819 = vmatpush1.bf16.msra.mxu0 %v807
    %820 = vmatprep.subr.bf16.mxu0 0
    %821 = vmatpush1.bf16.msra.mxu0 %v808
    %822 = vmatprep.subr.bf16.mxu0 0
    %823 = vmatpush1.bf16.msra.mxu0 %v809
    %824 = vmatprep.subr.bf16.mxu0 0
    %825 = vmatpush1.bf16.msra.mxu0 %v810
    %826 = vmatprep.subr.bf16.mxu0 0
    %827 = vmatpush1.bf16.msra.mxu0 0
    %828 = vmatprep.subr.bf16.mxu0 0
    %829 = vmatpush1.bf16.msra.mxu0 0
    %830 = vmatprep.subr.bf16.mxu0 0
    %831 = vmatpush1.bf16.msra.mxu0 0
    %832 = vmatprep.subr.bf16.mxu0 0
    %833 = vmatpush1.bf16.msra.mxu0 0
    %834 = vmatprep.subr.bf16.mxu0 0
    %835 = vmatpush1.bf16.msra.mxu0 0
    %836 = vmatprep.subr.bf16.mxu0 0
    %837 = vmatpush1.bf16.msra.mxu0 0
    %838 = vmatprep.subr.bf16.mxu0 0
    %839 = vmatpush1.bf16.msra.mxu0 0
    %840 = vmatprep.subr.bf16.mxu0 0
    %841 = vmatpush1.bf16.msra.mxu0 0
    %842 = vmatprep.subr.bf16.mxu0 0
    %843 = vmatpush1.bf16.msra.mxu0 0
    %844 = vmatprep.subr.bf16.mxu0 0
    %845 = vmatpush1.bf16.msra.mxu0 0
    %846 = vmatprep.subr.bf16.mxu0 0
    %847 = vmatpush1.bf16.msra.mxu0 0
    %848 = vmatprep.subr.bf16.mxu0 0
    %849 = vmatpush1.bf16.msra.mxu0 0
    %850 = vmatprep.mubr.bf16.mxu0 0
    %851 = vmatmul.mubr.bf16.gmra.mrb[0].mxu0 %v816
    %v852 = vpop.f32.mrb[0].mxu0
    %v853 = vadd.f32 %v789, %v852
    %v854 = vpop.f32.mrb[0].mxu0
    %v855 = vpop.f32.mrb[0].mxu0
    %v856 = vpop.f32.mrb[0].mxu0
    %857 = vdwg.mxu0
    %v858 = vadd.f32 %v853, %v698
    %v859 = vld [vmem:[%s15] sm:$0x1]
    %v860 = vld [vmem:[%s16] sm:$0x1]
    %v861 = vsel %vm194, %v858, 0.0
    %862 = vadd.xlane.f32.xlu0 %v861
    %v863 = vpop.xlane.xlu0 %862
    %v864 = vmul.f32 %v863, %v674
    %v865 = vsub.f32 %v858, %v864
    %v866 = vmul.f32 %v865, %v865
    %v867 = vsel %vm194, %v866, 0.0
    %868 = vadd.xlane.f32.xlu0 %v867
    %v869 = vpop.xlane.xlu0 %868
    %v870 = vmul.f32 %v869, %v674
    %v871 = vadd.f32 %v870, 1e-06
    %v872 = vrsqrt.pop %v871
    %v873 = vmul.f32 %v865, %v872
    %v875 = vlaneseq
    %v876 = vshrl.u32 %v875, 7
    %v877 = vsub.s32 0, %v876
    %v878 = vrot.slane %v859, %v877
    %v880 = vmul.f32 %v873, %v878
    %v882 = vlaneseq
    %v883 = vshrl.u32 %v882, 7
    %v884 = vsub.s32 0, %v883
    %v885 = vrot.slane %v860, %v884
    %v887 = vadd.f32 %v880, %v885
    %v888 = vsub.f32 %v433, %v887
    %889 = vst.msk [vmem:[#allocation15] sm:$0xff] %vm194, %v888
    %v890 = vld [vmem:[%s17] sm:$0x1]
    %v891 = vpack.c.bf16 %v432, %v432
    %vm892 = vcmask 64512
    %v894 = vsel %vm892, %v890, 0
    %vm896 = vcmask 1043456
    %v898 = vsel %vm896, %v891, 0
    %900 = vmatprep.subr.bf16.mxu0 0
    %901 = vmatpush1.bf16.msra.mxu0 %v898
    %902 = vmatprep.subr.bf16.mxu0 0
    %903 = vmatpush1.bf16.msra.mxu0 0
    %904 = vmatprep.subr.bf16.mxu0 0
    %905 = vmatpush1.bf16.msra.mxu0 0
    %906 = vmatprep.subr.bf16.mxu0 0
    %907 = vmatpush1.bf16.msra.mxu0 0
    %908 = vmatprep.subr.bf16.mxu0 0
    %909 = vmatpush1.bf16.msra.mxu0 0
    %910 = vmatprep.subr.bf16.mxu0 0
    %911 = vmatpush1.bf16.msra.mxu0 0
    %912 = vmatprep.subr.bf16.mxu0 0
    %913 = vmatpush1.bf16.msra.mxu0 0
    %914 = vmatprep.subr.bf16.mxu0 0
    %915 = vmatpush1.bf16.msra.mxu0 0
    %916 = vmatprep.subr.bf16.mxu0 0
    %917 = vmatpush1.bf16.msra.mxu0 0
    %918 = vmatprep.subr.bf16.mxu0 0
    %919 = vmatpush1.bf16.msra.mxu0 0
    %920 = vmatprep.subr.bf16.mxu0 0
    %921 = vmatpush1.bf16.msra.mxu0 0
    %922 = vmatprep.subr.bf16.mxu0 0
    %923 = vmatpush1.bf16.msra.mxu0 0
    %924 = vmatprep.subr.bf16.mxu0 0
    %925 = vmatpush1.bf16.msra.mxu0 0
    %926 = vmatprep.subr.bf16.mxu0 0
    %927 = vmatpush1.bf16.msra.mxu0 0
    %928 = vmatprep.subr.bf16.mxu0 0
    %929 = vmatpush1.bf16.msra.mxu0 0
    %930 = vmatprep.subr.bf16.mxu0 0
    %931 = vmatpush1.bf16.msra.mxu0 0
    %932 = vmatprep.mubr.bf16.mxu0 0
    %933 = vmatmul.mubr.bf16.gmra.mrb[0].mxu0 %v894
    %v934 = vpop.f32.mrb[0].mxu0
    %v935 = vadd.f32 0.0, %v934
    %v936 = vpop.f32.mrb[0].mxu0
    %v937 = vpop.f32.mrb[0].mxu0
    %v938 = vpop.f32.mrb[0].mxu0
    %939 = vdwg.mxu0
    %v940 = vmul.f32 %v935, 0.25
    %v941 = vpack.c.bf16 %v887, %v887
    %v943 = vsel %vm896, %v941, 0
    %945 = vmatprep.subr.bf16.mxu0 0
    %946 = vmatpush1.bf16.msra.mxu0 %v943
    %947 = vmatprep.subr.bf16.mxu0 0
    %948 = vmatpush1.bf16.msra.mxu0 0
    %949 = vmatprep.subr.bf16.mxu0 0
    %950 = vmatpush1.bf16.msra.mxu0 0
    %951 = vmatprep.subr.bf16.mxu0 0
    %952 = vmatpush1.bf16.msra.mxu0 0
    %953 = vmatprep.subr.bf16.mxu0 0
    %954 = vmatpush1.bf16.msra.mxu0 0
    %955 = vmatprep.subr.bf16.mxu0 0
    %956 = vmatpush1.bf16.msra.mxu0 0
    %957 = vmatprep.subr.bf16.mxu0 0
    %958 = vmatpush1.bf16.msra.mxu0 0
    %959 = vmatprep.subr.bf16.mxu0 0
    %960 = vmatpush1.bf16.msra.mxu0 0
    %961 = vmatprep.subr.bf16.mxu0 0
    %962 = vmatpush1.bf16.msra.mxu0 0
    %963 = vmatprep.subr.bf16.mxu0 0
    %964 = vmatpush1.bf16.msra.mxu0 0
    %965 = vmatprep.subr.bf16.mxu0 0
    %966 = vmatpush1.bf16.msra.mxu0 0
    %967 = vmatprep.subr.bf16.mxu0 0
    %968 = vmatpush1.bf16.msra.mxu0 0
    %969 = vmatprep.subr.bf16.mxu0 0
    %970 = vmatpush1.bf16.msra.mxu0 0
    %971 = vmatprep.subr.bf16.mxu0 0
    %972 = vmatpush1.bf16.msra.mxu0 0
    %973 = vmatprep.subr.bf16.mxu0 0
    %974 = vmatpush1.bf16.msra.mxu0 0
    %975 = vmatprep.subr.bf16.mxu0 0
    %976 = vmatpush1.bf16.msra.mxu0 0
    %977 = vmatprep.mubr.bf16.mxu0 0
    %978 = vmatmul.mubr.bf16.gmra.mrb[0].mxu0 %v894
    %v979 = vpop.f32.mrb[0].mxu0
    %v980 = vadd.f32 0.0, %v979
    %v981 = vpop.f32.mrb[0].mxu0
    %v982 = vpop.f32.mrb[0].mxu0
    %v983 = vpop.f32.mrb[0].mxu0
    %984 = vdwg.mxu0
    %v985 = vmul.f32 %v980, 0.25
    %987 = vrot.lane.b32.xlu0 %v985, 32
    %v988 = vpop.permute.xlu0 %987
    %v990 = vsel %vm194, %v940, %v988
    %v991 = vpack.c.bf16 %v990, %v990
    %v992 = vld [vmem:[%s18] sm:$0xf]
    %v993 = vld [vmem:[%s18 + $0x4] sm:$0xf]
    %v994 = vld [vmem:[%s18 + $0x8] sm:$0xf]
    %v995 = vld [vmem:[%s18 + $0xc] sm:$0xf]
    %v996 = vld [vmem:[%s18 + $0x10] sm:$0xf]
    %v997 = vld [vmem:[%s18 + $0x14] sm:$0xf]
    %v998 = vld [vmem:[%s18 + $0x18] sm:$0xf]
    %v999 = vld [vmem:[%s18 + $0x1c] sm:$0xf]
    %v1000 = vld [vmem:[%s19] sm:$0x1]
    %v1002 = vlaneseq
    %v1003 = vshrl.u32 %v1002, 7
    %v1004 = vsub.s32 0, %v1003
    %v1005 = vrot.slane %v1000, %v1004
    %v1015 = vunpack.c.l.b16 %v992
    %v1016 = vunpack.c.l.b16 %v993
    %v1017 = vunpack.c.l.b16 %v994
    %v1018 = vunpack.c.l.b16 %v995
    %v1019 = vunpack.c.l.b16 %v996
    %v1020 = vunpack.c.l.b16 %v997
    %v1021 = vunpack.c.l.b16 %v998
    %v1022 = vunpack.c.l.b16 %v999
    %v1023 = vpack.c.b16 %v1016, %v1015
    %v1024 = vpack.c.b16 %v1018, %v1017
    %v1025 = vpack.c.b16 %v1020, %v1019
    %v1026 = vpack.c.b16 %v1022, %v1021
    %v1032 = vsel %vm550, %v991, 0
    %1034 = vmatprep.subr.bf16.mxu0 0
    %1035 = vmatpush1.bf16.msra.mxu0 %v1023
    %1036 = vmatprep.subr.bf16.mxu0 0
    %1037 = vmatpush1.bf16.msra.mxu0 %v1024
    %1038 = vmatprep.subr.bf16.mxu0 0
    %1039 = vmatpush1.bf16.msra.mxu0 %v1025
    %1040 = vmatprep.subr.bf16.mxu0 0
    %1041 = vmatpush1.bf16.msra.mxu0 %v1026
    %1042 = vmatprep.subr.bf16.mxu0 0
    %1043 = vmatpush1.bf16.msra.mxu0 0
    %1044 = vmatprep.subr.bf16.mxu0 0
    %1045 = vmatpush1.bf16.msra.mxu0 0
    %1046 = vmatprep.subr.bf16.mxu0 0
    %1047 = vmatpush1.bf16.msra.mxu0 0
    %1048 = vmatprep.subr.bf16.mxu0 0
    %1049 = vmatpush1.bf16.msra.mxu0 0
    %1050 = vmatprep.subr.bf16.mxu0 0
    %1051 = vmatpush1.bf16.msra.mxu0 0
    %1052 = vmatprep.subr.bf16.mxu0 0
    %1053 = vmatpush1.bf16.msra.mxu0 0
    %1054 = vmatprep.subr.bf16.mxu0 0
    %1055 = vmatpush1.bf16.msra.mxu0 0
    %1056 = vmatprep.subr.bf16.mxu0 0
    %1057 = vmatpush1.bf16.msra.mxu0 0
    %1058 = vmatprep.subr.bf16.mxu0 0
    %1059 = vmatpush1.bf16.msra.mxu0 0
    %1060 = vmatprep.subr.bf16.mxu0 0
    %1061 = vmatpush1.bf16.msra.mxu0 0
    %1062 = vmatprep.subr.bf16.mxu0 0
    %1063 = vmatpush1.bf16.msra.mxu0 0
    %1064 = vmatprep.subr.bf16.mxu0 0
    %1065 = vmatpush1.bf16.msra.mxu0 0
    %1066 = vmatprep.mubr.bf16.mxu0 0
    %1067 = vmatmul.mubr.bf16.gmra.mrb[0].mxu0 %v1032
    %v1068 = vpop.f32.mrb[0].mxu0
    %v1069 = vadd.f32 %v1005, %v1068
    %v1070 = vpop.f32.mrb[0].mxu0
    %v1071 = vpop.f32.mrb[0].mxu0
    %v1072 = vpop.f32.mrb[0].mxu0
    %1073 = vdwg.mxu0
    %1074 = vst [vmem:[#allocation14] sm:$0x3] %v1069
    // Predicated region
    $region110: #{tpu_custom_call.1} parent=1 // pred_check
      _
    $region111: #{tpu_custom_call.1} parent=1 // pred_check_branch
      %1076 = sbr.rel (0) target = $region113
    $region112: #{tpu_custom_call.1} parent=1 // pred_region
      %s1078 = ssub.s32 32, 32
      %1079 = vsyncadd [#allocation4], %s1078
      %s1081 = sshll.u32 [#allocation14], 4
      %s1082 = int_to_ptr.vmem [resolvable:$true] %s1081
      %1084 = dma.vmem_to_hbm [thread:$0]  %s1082, 32, %s20, [#allocation4]
    $region113: #{tpu_custom_call.1} parent=1 // pred_fallthru
      _
    // Predicated region
    $region114: #{tpu_custom_call.1} parent=1 // pred_check
      _
    $region115: #{tpu_custom_call.1} parent=1 // pred_check_branch
      %1086 = sbr.rel (0) target = $region117
    $region116: #{tpu_custom_call.1} parent=1 // pred_region
      %s1088 = ssub.s32 128, 128
      %1089 = vsyncadd [#allocation16], %s1088
      %s1091 = sshll.u32 [#allocation15], 4
      %s1092 = int_to_ptr.vmem [resolvable:$true] %s1091
      %1094 = dma.vmem_to_hbm [thread:$0]  %s1092, 128, %s21, [#allocation16]
    $region117: #{tpu_custom_call.1} parent=1 // pred_fallthru
      _
    // Predicated region
    $region118: #{tpu_custom_call.1} parent=1 // pred_check
      _
    $region119: #{tpu_custom_call.1} parent=1 // pred_check_branch
      %1096 = sbr.rel (0) target = $region121
    $region120: #{tpu_custom_call.1} parent=1 // pred_region
      %1097 = dma.done [#allocation4], 32
    $region121: #{tpu_custom_call.1} parent=1 // pred_fallthru
      _
    // Predicated region
    $region122: #{tpu_custom_call.1} parent=1 // pred_check
      _
    $region123: #{tpu_custom_call.1} parent=1 // pred_check_branch
      %1099 = sbr.rel (0) target = $region125
    $region124: #{tpu_custom_call.1} parent=1 // pred_region
      %1100 = dma.done [#allocation16], 128
    $region125: #{tpu_custom_call.1} parent=1 // pred_fallthru
      _
    %1101 = vsyncpa [#allocation3], 1
    %1102 = vsyncpa [#allocation6], 1
    %1103 = vsyncpa [#allocation9], 1
    %1104 = vsyncpa [#allocation12], 1
    %1105 = vsyncpa [#allocation4], 1
    %1106 = vsyncpa [#allocation16], 1

</llo_original>
